<compile_context>
chip_gen: v7x
topology: tpu7x:2x2x1
jax: 0.10.0
libtpu: 0.0.40
codegen_flags: <defaults>
</compile_context>

<pallas_src>
from functools import partial

import jax
import jax.numpy as jnp
from jax.experimental import pallas as pl
from jax.experimental.pallas import tpu as pltpu

_LANES = 128


def _embedder_kernel(x_ref, s_ref, pos_ref, coef_ref, out_ref, *, binary):
    """One (row-tile, batch) grid step.

    x_ref   : (1, RT, 128)        int32    lane-dense edge-type indices
    s_ref   : (128, W)            bfloat16 0/1 selection matrix, S[c, c*E+e] = 1
    pos_ref : (RT, W)             float32  positional embedding (+ base if binary)
    coef_ref: (1, W) or (V, W)    float32  diff row (binary) / tiled table (general)
    out_ref : (1, RT, W)          float32  packed output, W = 128 * E
    """
    x_f = x_ref[0].astype(jnp.float32).astype(jnp.bfloat16)          # (RT, 128)
    # MXU expansion: x_expand[r, c*E + e] = x[r, c]   (exact in bf16)
    x_expand = jnp.dot(x_f, s_ref[...], preferred_element_type=jnp.float32)

    if binary:
        # table[x] = table[0] + x * (table[1] - table[0]); table[0] is already
        # folded into pos_ref by the wrapper -> mul + add per output vreg.
        out_ref[0] = x_expand * coef_ref[...] + pos_ref[...]
    else:
        emb = jnp.broadcast_to(coef_ref[0:1, :], x_expand.shape)
        for v in range(1, coef_ref.shape[0]):
            emb = jnp.where(x_expand == v, coef_ref[v:v + 1, :], emb)
        out_ref[0] = emb + pos_ref[...]


def _pick_row_tile(rx, wout, batch, target_bytes=8 * 1024 * 1024):
    """Pick (row_tile, padded_row_count) for the packed (rx, wout) f32 output."""
    cap = max(8, (target_bytes // (4 * wout)) // 8 * 8)
    if rx <= cap:
        # Small problem: split the row axis in two when the batch axis alone
        # cannot feed both v7x TensorCores (only when the split is pad-free).
        if batch == 1 and rx >= 16 and rx % 16 == 0:
            return rx // 2, rx
        return rx, rx
    rxp = -(-rx // cap) * cap
    return cap, rxp


def embedder_forward(x, bin_table, pos_table, bin_size):
    """x: (B, N, N) integer  ->  (B, N, N, E) float32."""
    B, N, _ = x.shape
    edge_types, E = bin_table.shape
    binary = edge_types == 2
    M = N * N
    W = _LANES * E                                  # lanes per packed output row
    Rx = -(-M // _LANES)                            # packed rows (ceil)

    RT, Rxp = _pick_row_tile(Rx, W, B)
    Mp = Rxp * _LANES
    n_r = Rxp // RT
    grid = (n_r, B)                                 # batch innermost -> pos reuse

    # ---- lane-dense index layout (free reshape + zero pad for robustness) ----
    x_flat = x.reshape(B, M).astype(jnp.int32)
    if Mp > M:
        x_flat = jnp.pad(x_flat, ((0, 0), (0, Mp - M)))
    x_dense = x_flat.reshape(B, Rxp, _LANES)

    # ---- batch-invariant positional embedding (computed once, outside) -------
    idx = jnp.arange(N)
    rel = jnp.clip(idx[None, :] - idx[:, None], -bin_size, bin_size) + bin_size
    pos_flat = jnp.take(pos_table.astype(jnp.float32), rel.reshape(-1),
                        axis=0).reshape(-1)                           # (M*E,)
    if Mp > M:
        pos_flat = jnp.pad(pos_flat, (0, (Mp - M) * E))
    pos_packed = pos_flat.reshape(Rxp, W)

    # ---- constant operands ----------------------------------------------------
    # 0/1 selection matrix: S[c, c*E + e] = 1  (exact in bf16)
    sel = (jnp.arange(W)[None, :] // E ==
           jnp.arange(_LANES)[:, None]).astype(jnp.bfloat16)          # (128, W)

    tab = bin_table.astype(jnp.float32)
    if binary:
        coef = jnp.tile(tab[1] - tab[0], _LANES)[None, :]             # (1, W)
        pos_packed = pos_packed + jnp.tile(tab[0], _LANES)[None, :]   # fold base
    else:
        coef = jnp.tile(tab, (1, _LANES))                             # (V, W)

    # ---- VMEM / cost bookkeeping ----------------------------------------------
    block_bytes = (2 * RT * _LANES * 4          # x blocks (double-buffered)
                   + 2 * RT * W * 4             # pos blocks
                   + 2 * _LANES * W * 2         # selection matrix
                   + 2 * coef.shape[0] * W * 4  # coef
                   + 2 * RT * W * 4)            # output blocks
    vmem_limit = max(32 * 1024 * 1024,
                     min(block_bytes + (4 << 20), 48 * 1024 * 1024))
    cost = pl.CostEstimate(
        flops=2 * B * Rxp * _LANES * W + 2 * B * Rxp * W,
        transcendentals=0,
        bytes_accessed=(B * Mp * 4 + Rxp * W * 4 + _LANES * W * 2
                        + coef.size * 4 + B * Rxp * W * 4))

    out_packed = pl.pallas_call(
        partial(_embedder_kernel, binary=binary),
        out_shape=jax.ShapeDtypeStruct((B, Rxp, W), jnp.float32),
        grid_spec=pltpu.PrefetchScalarGridSpec(
            num_scalar_prefetch=0,
            grid=grid,
            in_specs=[
                pl.BlockSpec((1, RT, _LANES), lambda r, b: (b, r, 0)),
                pl.BlockSpec((_LANES, W), lambda r, b: (0, 0)),
                pl.BlockSpec((RT, W), lambda r, b: (r, 0)),
                pl.BlockSpec((coef.shape[0], W), lambda r, b: (0, 0)),
            ],
            out_specs=pl.BlockSpec((1, RT, W), lambda r, b: (b, r, 0)),
        ),
        compiler_params=pltpu.CompilerParams(
            dimension_semantics=("parallel", "parallel"),
            vmem_limit_bytes=vmem_limit,
        ),
        cost_estimate=cost,
    )(x_dense, sel, pos_packed, coef)

    out_flat = out_packed.reshape(B, Mp * E)
    if Mp > M:
        out_flat = out_flat[:, : M * E]
    return out_flat.reshape(B, N, N, E)


def _reference(x, bin_table, pos_table, bin_size):
    """Plain-JAX reference matching the PyTorch forward."""
    N = x.shape[-1]
    idx = jnp.arange(N)
    rel = idx[None, :] - idx[:, None]
    pos_idx = jnp.clip(rel, -bin_size, bin_size) + bin_size
    binary_embedd = jnp.take(bin_table, x, axis=0)              # (B, N, N, E)
    positional_embedd = jnp.take(pos_table, pos_idx, axis=0)    # (N, N, E)
    return binary_embedd + positional_embedd[None]


if __name__ == "__main__":
    # Small shapes implied by the module: binary adjacency matrix.
    batch, N = 2, 16
    embedd_size = 32
    edge_types = 2
    bin_size = 4

    key = jax.random.PRNGKey(0)
    k_bin, k_pos, k_x = jax.random.split(key, 3)

    # nn.Embedding default init: N(0, 1)
    bin_table = jax.random.normal(k_bin, (edge_types, embedd_size), jnp.float32)
    pos_table = jax.random.normal(k_pos, (2 * bin_size + 1, embedd_size),
                                  jnp.float32)

    x = jax.random.randint(k_x, (batch, N, N), 0, edge_types, jnp.int32)

    out = embedder_forward(x, bin_table, pos_table, bin_size)
    out = jax.block_until_ready(out)

    ref = _reference(x, bin_table, pos_table, bin_size)
    assert out.shape == (batch, N, N, embedd_size), out.shape
    assert jnp.allclose(out, ref, atol=1e-5, rtol=1e-5), "mismatch vs reference"

    print("KERNEL_OK")
</pallas_src>

<mosaic_0001>
module attributes {stable_mosaic.version = 11 : i64} {
  func.func @_embedder_kernel(%arg0: i32, %arg1: i32, %arg2: memref<1x2x128xi32, #tpu.memory_space<vmem>>, %arg3: memref<128x4096xbf16, #tpu.memory_space<vmem>>, %arg4: memref<2x4096xf32, #tpu.memory_space<vmem>>, %arg5: memref<1x4096xf32, #tpu.memory_space<vmem>>, %arg6: memref<1x2x4096xf32, #tpu.memory_space<vmem>>) attributes {dimension_semantics = [#tpu.dimension_semantics<parallel>, #tpu.dimension_semantics<parallel>], iteration_bounds = array<i64: 1, 2>, scalar_prefetch = 0 : i64, scratch_operands = 0 : i64, tpu.core_type = #tpu.core_type<tc>, window_params = [{transform_indices = @transform_0, window_bounds = array<i64: 1, 2, 128>}, {pipeline_mode = #tpu.pipeline_mode<synchronous>, transform_indices = @transform_1, window_bounds = array<i64: 128, 4096>}, {transform_indices = @transform_2, window_bounds = array<i64: 2, 4096>}, {pipeline_mode = #tpu.pipeline_mode<synchronous>, transform_indices = @transform_3, window_bounds = array<i64: 1, 4096>}, {transform_indices = @transform_4, window_bounds = array<i64: 1, 2, 4096>}]} {
    %c0 = arith.constant 0 : index
    %c0_0 = arith.constant 0 : index
    %c0_1 = arith.constant 0 : index
    %0 = vector.load %arg2[%c0, %c0_0, %c0_1] : memref<1x2x128xi32, #tpu.memory_space<vmem>>, vector<1x2x128xi32>
    %1 = vector.shape_cast %0 : vector<1x2x128xi32> to vector<2x128xi32>
    %2 = arith.sitofp %1 : vector<2x128xi32> to vector<2x128xf32>
    %3 = arith.truncf %2 : vector<2x128xf32> to vector<2x128xbf16>
    %c0_2 = arith.constant 0 : index
    %c0_3 = arith.constant 0 : index
    %4 = vector.load %arg3[%c0_2, %c0_3] : memref<128x4096xbf16, #tpu.memory_space<vmem>>, vector<128x4096xbf16>
    %cst = arith.constant dense<0.000000e+00> : vector<2x4096xf32>
    %5 = tpu.matmul %3, %4, %cst {dimension_numbers = #tpu.dot_dimension_numbers<[1], [0], [0], [1], [0, 0, 1, 1], [], []>} : vector<2x128xbf16>, vector<128x4096xbf16>, vector<2x4096xf32> -> vector<2x4096xf32>
    %c0_4 = arith.constant 0 : index
    %c0_5 = arith.constant 0 : index
    %6 = vector.load %arg5[%c0_4, %c0_5] : memref<1x4096xf32, #tpu.memory_space<vmem>>, vector<1x4096xf32>
    %7 = vector.broadcast %6 : vector<1x4096xf32> to vector<2x4096xf32>
    %8 = arith.mulf %5, %7 : vector<2x4096xf32>
    %c0_6 = arith.constant 0 : index
    %c0_7 = arith.constant 0 : index
    %9 = vector.load %arg4[%c0_6, %c0_7] : memref<2x4096xf32, #tpu.memory_space<vmem>>, vector<2x4096xf32>
    %10 = arith.addf %8, %9 : vector<2x4096xf32>
    %c0_8 = arith.constant 0 : index
    %c0_9 = arith.constant 0 : index
    %c0_10 = arith.constant 0 : index
    %11 = vector.load %arg6[%c0_8, %c0_9, %c0_10] : memref<1x2x4096xf32, #tpu.memory_space<vmem>>, vector<1x2x4096xf32>
    %12 = vector.shape_cast %11 : vector<1x2x4096xf32> to vector<2x4096xf32>
    %13 = vector.shape_cast %10 : vector<2x4096xf32> to vector<1x2x4096xf32>
    tpu.vector_store %arg6[%c0_8, %c0_9, %c0_10], %13 {strides = array<i32>} : memref<1x2x4096xf32, #tpu.memory_space<vmem>>, vector<1x2x4096xf32>,
    return
  }
  func.func @transform_0(%arg0: i32, %arg1: i32) -> (i32, i32, i32) {
    %c0_i32 = arith.constant 0 : i32
    %c0_i32_0 = arith.constant 0 : i32
    return %arg1, %arg0, %c0_i32 : i32, i32, i32
  }
  func.func @transform_1(%arg0: i32, %arg1: i32) -> (i32, i32) {
    %c0_i32 = arith.constant 0 : i32
    %c0_i32_0 = arith.constant 0 : i32
    %c0_i32_1 = arith.constant 0 : i32
    return %c0_i32, %c0_i32_0 : i32, i32
  }
  func.func @transform_2(%arg0: i32, %arg1: i32) -> (i32, i32) {
    %c0_i32 = arith.constant 0 : i32
    %c0_i32_0 = arith.constant 0 : i32
    return %arg0, %c0_i32 : i32, i32
  }
  func.func @transform_3(%arg0: i32, %arg1: i32) -> (i32, i32) {
    %c0_i32 = arith.constant 0 : i32
    %c0_i32_0 = arith.constant 0 : i32
    %c0_i32_1 = arith.constant 0 : i32
    return %c0_i32, %c0_i32_0 : i32, i32
  }
  func.func @transform_4(%arg0: i32, %arg1: i32) -> (i32, i32, i32) {
    %c0_i32 = arith.constant 0 : i32
    %c0_i32_0 = arith.constant 0 : i32
    return %arg1, %arg0, %c0_i32 : i32, i32, i32
  }
}

</mosaic_0001>

<llo_original>
// kernel: tpu_custom_call.1
$region0: #{tpu_custom_call.1}
  #allocation0 [shape = 'u32[]', space=smem, size = 0x4, offset = 0x4, fixed_abs, tag = 'smem constant byte address 0x4 - core index']
  #allocation1 [shape = 'u32[144,128]{1,0:T(1,128)}', space=vmem, size = 0x12000, scoped, tag = 'internal scratch']
  %s0 = inlined_call_operand.hbm [shape: s32[2,2,128], index: 0, kind: input, shape index: {}]
  %s1 = inlined_call_operand.hbm [shape: bf16[128,4096], index: 1, kind: input, shape index: {}]
  %s2 = inlined_call_operand.hbm [shape: f32[2,4096], index: 2, kind: input, shape index: {}]
  %s3 = inlined_call_operand.hbm [shape: f32[1,4096], index: 3, kind: input, shape index: {}]
  %s4 = inlined_call_operand.hbm [shape: f32[2,2,4096], index: 4, kind: output, shape index: {}]
  %s5 = sld [smem:[#allocation0]]
  $region65: #{tpu_custom_call.1} parent=0
    _
  %s7 = ssub.s32 1, %s5
  %s8 = scalar_select 0, %s7, %s5
  $region1: #{tpu_custom_call.1} parent=0
    #allocation2 [shape = 'u8[2048]{0}', space=vmem, size = 0x800, scoped, tag = 'input window, operand 0']
    #allocation3 [shape = 's32[2]{0}', space=sflag, size = 0x8, scoped, tag = 'scoped memory for tpu_custom_call.1']
    #allocation4 [shape = 's32[2]{0}', space=sflag, size = 0x8, scoped, tag = 'scoped memory for tpu_custom_call.1']
    #allocation5 [shape = 'u8[1048576]{0}', space=vmem, size = 0x100000, scoped, tag = 'input window, operand 1, single buffered']
    #allocation6 [shape = 's32[1]{0}', space=sflag, size = 0x4, scoped, tag = 'scoped memory for tpu_custom_call.1']
    #allocation7 [shape = 'u8[32768]{0}', space=vmem, size = 0x8000, scoped, tag = 'input window, operand 2, single buffered']
    #allocation8 [shape = 'u8[16384]{0}', space=vmem, size = 0x4000, scoped, tag = 'input window, operand 3, single buffered']
    #allocation9 [shape = 's32[1]{0}', space=sflag, size = 0x4, scoped, tag = 'scoped memory for tpu_custom_call.1']
    #allocation10 [shape = 'u8[65536]{0}', space=vmem, size = 0x10000, scoped, tag = 'output window, operand 0']
    %9 = vsyncpa [#allocation3], 0
    %s10 = scalar_lea.sflag [#allocation3], 1
    %11 = vsyncpa %s10, 0
    %12 = vsyncpa [#allocation6], 0
    %13 = vsyncpa [#allocation9], 0
    %14 = vsyncpa [#allocation4], 0
    %s15 = scalar_lea.sflag [#allocation4], 1
    %16 = vsyncpa %s15, 0
    loop: start=0, step=1, limit=4
    $region2: #{tpu_custom_call.1} parent=1 // loop_pre_header
      _
    $region3: #{tpu_custom_call.1} parent=1 // loop_header
      %s18 = sphi 0, %s22
      %p19 = scmp.ge.s32.totalorder %s18, 4
      %s25 = sphi 0, %s37
      %s26 = sphi 0, %s33
      %s27 = sphi 0, %s25
      %s28 = sphi 0, %s26
      %s29 = sphi 0, %s27
      %s30 = sphi 0, %s28
      %s42 = sphi 0, %s44
      %s45 = sphi 0, %s42
      %s46 = sphi 0, %s45
      %s62 = sphi 0, %s46
      %s66 = sphi 0, %s66
      %s68 = sphi 0, %s66
      %s69 = sphi 0, %s68
      %s83 = sphi 0, %s69
      %s89 = sphi 0, %s91
      %s92 = sphi 0, %s89
      %s93 = sphi 0, %s92
      %s109 = sphi 0, %s93
      %s113 = sphi 0, %s113
      %s115 = sphi 0, %s113
      %s116 = sphi 0, %s115
      %s130 = sphi 0, %s116
      %s138 = sphi 0, %s140
      %s141 = sphi 0, %s138
      %s142 = sphi 0, %s141
      %s158 = sphi 0, %s142
    $region4: #{tpu_custom_call.1} parent=1 // loop_header_branch
      %21 = sbr.rel (%p19) target = $region8
    $region5: #{tpu_custom_call.1} parent=1 // loop_body
      %s23 = ssub.s32 %s18, 1
      %s24 = ssub.s32 %s18, 2
      %s31 = sadd.s32 1, %s26
      %p32 = scmp.ge.s32.totalorder %s31, 2
      %s33 = scalar_select %p32, 0, %s31
      %s34 = sadd.s32 1, %s25
      %s35 = scalar_select %p32, %s34, %s25
      %p36 = scmp.ge.s32.totalorder %s35, 1
      %s37 = scalar_select %p36, 0, %s35
      %s38 = ssub.s32 %s26, %s33
      %s39 = ssub.s32 %s25, %s37
      %s40 = sor.u32 %s38, %s39
      %p41 = scmp.eq.s32.totalorder %s40, 0
      %s43 = sadd.s32 %s42, 1
      %s44 = scalar_select %p41, %s42, %s43
      %p47 = pneg %p41
      %p48 = scmp.eq.s32.totalorder %s18, 1
      %p49 = por %p47, %p48
      %p50 = scmp.ne.s32.totalorder %s42, %s45
      %p51 = scmp.eq.s32.totalorder %s18, 0
      %p52 = por %p50, %p51
      %p53 = scmp.ne.s32.totalorder %s42, %s45
      %p54 = scmp.eq.s32.totalorder %s23, 1
      %p55 = por %p53, %p54
      %p56 = scmp.ne.s32.totalorder %s45, %s46
      %p57 = scmp.eq.s32.totalorder %s23, 0
      %p58 = por %p56, %p57
      %p59 = scmp.ne.s32.totalorder %s45, %s46
      %p60 = scmp.eq.s32.totalorder %s24, 1
      %p61 = por %p59, %p60
      %p63 = scmp.ne.s32.totalorder %s46, %s62
      %p64 = scmp.eq.s32.totalorder %s24, 0
      %p65 = por %p63, %p64
      %s67 = sadd.s32 %s66, 1
      %p70 = scmp.eq.s32.totalorder %s18, 1
      %p71 = scmp.ne.s32.totalorder %s66, %s68
      %p72 = scmp.eq.s32.totalorder %s18, 0
      %p73 = por %p71, %p72
      %p74 = scmp.ne.s32.totalorder %s66, %s68
      %p75 = scmp.eq.s32.totalorder %s23, 1
      %p76 = por %p74, %p75
      %p77 = scmp.ne.s32.totalorder %s68, %s69
      %p78 = scmp.eq.s32.totalorder %s23, 0
      %p79 = por %p77, %p78
      %p80 = scmp.ne.s32.totalorder %s68, %s69
      %p81 = scmp.eq.s32.totalorder %s24, 1
      %p82 = por %p80, %p81
      %p84 = scmp.ne.s32.totalorder %s69, %s83
      %p85 = scmp.eq.s32.totalorder %s24, 0
      %p86 = por %p84, %p85
      %s87 = ssub.s32 %s25, %s37
      %p88 = scmp.eq.s32.totalorder %s87, 0
      %s90 = sadd.s32 %s89, 1
      %s91 = scalar_select %p88, %s89, %s90
      %p94 = pneg %p88
      %p95 = scmp.eq.s32.totalorder %s18, 1
      %p96 = por %p94, %p95
      %p97 = scmp.ne.s32.totalorder %s89, %s92
      %p98 = scmp.eq.s32.totalorder %s18, 0
      %p99 = por %p97, %p98
      %p100 = scmp.ne.s32.totalorder %s89, %s92
      %p101 = scmp.eq.s32.totalorder %s23, 1
      %p102 = por %p100, %p101
      %p103 = scmp.ne.s32.totalorder %s92, %s93
      %p104 = scmp.eq.s32.totalorder %s23, 0
      %p105 = por %p103, %p104
      %p106 = scmp.ne.s32.totalorder %s92, %s93
      %p107 = scmp.eq.s32.totalorder %s24, 1
      %p108 = por %p106, %p107
      %p110 = scmp.ne.s32.totalorder %s93, %s109
      %p111 = scmp.eq.s32.totalorder %s24, 0
      %p112 = por %p110, %p111
      %s114 = sadd.s32 %s113, 1
      %p117 = scmp.eq.s32.totalorder %s18, 1
      %p118 = scmp.ne.s32.totalorder %s113, %s115
      %p119 = scmp.eq.s32.totalorder %s18, 0
      %p120 = por %p118, %p119
      %p121 = scmp.ne.s32.totalorder %s113, %s115
      %p122 = scmp.eq.s32.totalorder %s23, 1
      %p123 = por %p121, %p122
      %p124 = scmp.ne.s32.totalorder %s115, %s116
      %p125 = scmp.eq.s32.totalorder %s23, 0
      %p126 = por %p124, %p125
      %p127 = scmp.ne.s32.totalorder %s115, %s116
      %p128 = scmp.eq.s32.totalorder %s24, 1
      %p129 = por %p127, %p128
      %p131 = scmp.ne.s32.totalorder %s116, %s130
      %p132 = scmp.eq.s32.totalorder %s24, 0
      %p133 = por %p131, %p132
      %s134 = ssub.s32 %s26, %s33
      %s135 = ssub.s32 %s25, %s37
      %s136 = sor.u32 %s134, %s135
      %p137 = scmp.eq.s32.totalorder %s136, 0
      %s139 = sadd.s32 %s138, 1
      %s140 = scalar_select %p137, %s138, %s139
      %p143 = pneg %p137
      %p144 = scmp.eq.s32.totalorder %s18, 1
      %p145 = por %p143, %p144
      %p146 = scmp.ne.s32.totalorder %s138, %s141
      %p147 = scmp.eq.s32.totalorder %s18, 0
      %p148 = por %p146, %p147
      %p149 = scmp.ne.s32.totalorder %s138, %s141
      %p150 = scmp.eq.s32.totalorder %s23, 1
      %p151 = por %p149, %p150
      %p152 = scmp.ne.s32.totalorder %s141, %s142
      %p153 = scmp.eq.s32.totalorder %s23, 0
      %p154 = por %p152, %p153
      %p155 = scmp.ne.s32.totalorder %s141, %s142
      %p156 = scmp.eq.s32.totalorder %s24, 1
      %p157 = por %p155, %p156
      %p159 = scmp.ne.s32.totalorder %s142, %s158
      %p160 = scmp.eq.s32.totalorder %s24, 0
      %p161 = por %p159, %p160
      %p162 = scmp.le.s32.totalorder 1, %s18
      %p163 = scmp.lt.s32.totalorder %s18, 3
      %p164 = pnand %p162, %p163
      %p165 = pneg %p164
      // Predicated region
      $region9: #{tpu_custom_call.1} parent=5 // pred_check
        _
      $region10: #{tpu_custom_call.1} parent=5 // pred_check_branch
        %167 = sbr.rel (%p164) target = $region12
      $region11: #{tpu_custom_call.1} parent=5 // pred_region
        %s168 = ssub.s32 %s18, 1
        // Predicated region
        $region13: #{tpu_custom_call.1} parent=11 // pred_check
          %p169 = pneg %p79
        $region14: #{tpu_custom_call.1} parent=11 // pred_check_branch
          %171 = sbr.rel (%p169) target = $region16
        $region15: #{tpu_custom_call.1} parent=11 // pred_region
          %s173 = ssub.s32 32768, 32768
          %174 = vsyncadd [#allocation6], %s173
          %s175 = sshll.u32 [#allocation5], 4
          %s176 = int_to_ptr.vmem [resolvable:$true] %s175
          %181 = dma.hbm_to_vmem [thread:$0]  %s1, 32768, %s176, [#allocation6], 2048, 2048, 128
        $region16: #{tpu_custom_call.1} parent=11 // pred_fallthru
          _
        // Predicated region
        $region17: #{tpu_custom_call.1} parent=11 // pred_check
          %p182 = pneg %p105
        $region18: #{tpu_custom_call.1} parent=11 // pred_check_branch
          %184 = sbr.rel (%p182) target = $region20
        $region19: #{tpu_custom_call.1} parent=11 // pred_region
          %s186 = ssub.s32 1024, 1024
          %187 = vsyncadd [#allocation6], %s186
          %s188 = smul.addr %s27, 32
          %s189 = smul.addr %s188, 32
          %s190 = scalar_lea.hbm %s2, %s189
          %s192 = sshll.u32 [#allocation7], 4
          %s193 = int_to_ptr.vmem [resolvable:$true] %s192
          %195 = dma.hbm_to_vmem [thread:$0]  %s190, 1024, %s193, [#allocation6]
        $region20: #{tpu_custom_call.1} parent=11 // pred_fallthru
          _
        // Predicated region
        $region21: #{tpu_custom_call.1} parent=11 // pred_check
          %p196 = pneg %p126
        $region22: #{tpu_custom_call.1} parent=11 // pred_check_branch
          %198 = sbr.rel (%p196) target = $region24
        $region23: #{tpu_custom_call.1} parent=11 // pred_region
          %s200 = ssub.s32 512, 512
          %201 = vsyncadd [#allocation9], %s200
          %s203 = sshll.u32 [#allocation8], 4
          %s204 = int_to_ptr.vmem [resolvable:$true] %s203
          %206 = dma.hbm_to_vmem [thread:$0]  %s3, 512, %s204, [#allocation9]
        $region24: #{tpu_custom_call.1} parent=11 // pred_fallthru
          _
      $region12: #{tpu_custom_call.1} parent=5 // pred_fallthru
        _
      %p207 = scmp.lt.s32.totalorder %s18, 2
      // Predicated region
      $region25: #{tpu_custom_call.1} parent=5 // pred_check
        %p208 = pneg %p207
      $region26: #{tpu_custom_call.1} parent=5 // pred_check_branch
        %210 = sbr.rel (%p208) target = $region28
      $region27: #{tpu_custom_call.1} parent=5 // pred_region
        // Predicated region
        $region29: #{tpu_custom_call.1} parent=27 // pred_check
          %p211 = pneg %p52
        $region30: #{tpu_custom_call.1} parent=27 // pred_check_branch
          %213 = sbr.rel (%p211) target = $region32
        $region31: #{tpu_custom_call.1} parent=27 // pred_region
          %s214 = sand.u32 %s42, 1
          %s215 = scalar_lea.sflag [#allocation3], %s214
          %s216 = sand.u32 %s42, 1
          %s217 = smul.addr %s216, 2
          %s218 = scalar_lea.vmem [#allocation2], %s217
          %s220 = ssub.s32 32, 32
          %221 = vsyncadd %s215, %s220
          %s222 = sadd.s32 %s25, %s26
          %s223 = smul.addr %s222, 32
          %s224 = scalar_lea.hbm %s0, %s223
          %s226 = sshll.u32 %s218, 4
          %s227 = int_to_ptr.vmem [resolvable:$true] %s226
          %229 = dma.hbm_to_vmem [thread:$0]  %s224, 32, %s227, %s215
        $region32: #{tpu_custom_call.1} parent=27 // pred_fallthru
          _
      $region28: #{tpu_custom_call.1} parent=5 // pred_fallthru
        _
      %p230 = scmp.le.s32.totalorder 1, %s18
      %p231 = scmp.lt.s32.totalorder %s18, 3
      %p232 = pnand %p230, %p231
      %p233 = pneg %p232
      // Predicated region
      $region33: #{tpu_custom_call.1} parent=5 // pred_check
        _
      $region34: #{tpu_custom_call.1} parent=5 // pred_check_branch
        %235 = sbr.rel (%p232) target = $region36
      $region35: #{tpu_custom_call.1} parent=5 // pred_region
        %s236 = ssub.s32 %s18, 1
        %s237 = sand.u32 %s45, 1
        %s238 = scalar_lea.sflag [#allocation3], %s237
        %s239 = sand.u32 %s45, 1
        %s240 = smul.addr %s239, 2
        %s241 = scalar_lea.vmem [#allocation2], %s240
        // Predicated region
        $region37: #{tpu_custom_call.1} parent=35 // pred_check
          %p242 = pneg %p58
        $region38: #{tpu_custom_call.1} parent=35 // pred_check_branch
          %244 = sbr.rel (%p242) target = $region40
        $region39: #{tpu_custom_call.1} parent=35 // pred_region
          %245 = dma.done %s238, 32
        $region40: #{tpu_custom_call.1} parent=35 // pred_fallthru
          _
        // Predicated region
        $region41: #{tpu_custom_call.1} parent=35 // pred_check
          %p246 = pneg %p79
        $region42: #{tpu_custom_call.1} parent=35 // pred_check_branch
          %248 = sbr.rel (%p246) target = $region44
        $region43: #{tpu_custom_call.1} parent=35 // pred_region
          %249 = dma.done [#allocation6], 32768
        $region44: #{tpu_custom_call.1} parent=35 // pred_fallthru
          _
        // Predicated region
        $region45: #{tpu_custom_call.1} parent=35 // pred_check
          %p250 = pneg %p105
        $region46: #{tpu_custom_call.1} parent=35 // pred_check_branch
          %252 = sbr.rel (%p250) target = $region48
        $region47: #{tpu_custom_call.1} parent=35 // pred_region
          %253 = dma.done [#allocation6], 1024
        $region48: #{tpu_custom_call.1} parent=35 // pred_fallthru
          _
        // Predicated region
        $region49: #{tpu_custom_call.1} parent=35 // pred_check
          %p254 = pneg %p126
        $region50: #{tpu_custom_call.1} parent=35 // pred_check_branch
          %256 = sbr.rel (%p254) target = $region52
        $region51: #{tpu_custom_call.1} parent=35 // pred_region
          %257 = dma.done [#allocation9], 512
        $region52: #{tpu_custom_call.1} parent=35 // pred_fallthru
          _
        %s258 = sand.u32 %s45, 1
        %s259 = scalar_lea.sflag [#allocation3], %s258
        %s260 = sand.u32 %s45, 1
        %s261 = smul.addr %s260, 2
        %s262 = scalar_lea.vmem [#allocation2], %s261
        %p263 = pneg %p58
        %p264 = pneg %p55
        %p265 = pneg %p79
        %p266 = pneg %p76
        %p267 = pneg %p105
        %p268 = pneg %p102
        %p269 = pneg %p126
        %p270 = pneg %p123
        %p271 = pneg %p154
        %p272 = pneg %p151
        %s273 = sand.u32 %s141, 1
        %s274 = scalar_lea.sflag [#allocation4], %s273
        %s275 = sand.u32 %s141, 1
        %s276 = smul.addr %s275, 64
        %s277 = scalar_lea.vmem [#allocation10], %s276
        %v279 = vld [vmem:[%s241] sm:$0x3]
        %v280 = vcvt.s32.f32 %v279
        %v281 = vpack.c.bf16 %v280, %v280
        %v282 = vld [vmem:[#allocation5] sm:$0xff]
        %v283 = vld [vmem:[#allocation5 + $0x8] sm:$0xff]
        %v284 = vld [vmem:[#allocation5 + $0x10] sm:$0xff]
        %v285 = vld [vmem:[#allocation5 + $0x18] sm:$0xff]
        %v286 = vld [vmem:[#allocation5 + $0x20] sm:$0xff]
        %v287 = vld [vmem:[#allocation5 + $0x28] sm:$0xff]
        %v288 = vld [vmem:[#allocation5 + $0x30] sm:$0xff]
        %v289 = vld [vmem:[#allocation5 + $0x38] sm:$0xff]
        %v290 = vld [vmem:[#allocation5 + $0x40] sm:$0xff]
        %v291 = vld [vmem:[#allocation5 + $0x48] sm:$0xff]
        %v292 = vld [vmem:[#allocation5 + $0x50] sm:$0xff]
        %v293 = vld [vmem:[#allocation5 + $0x58] sm:$0xff]
        %v294 = vld [vmem:[#allocation5 + $0x60] sm:$0xff]
        %v295 = vld [vmem:[#allocation5 + $0x68] sm:$0xff]
        %v296 = vld [vmem:[#allocation5 + $0x70] sm:$0xff]
        %v297 = vld [vmem:[#allocation5 + $0x78] sm:$0xff]
        %v298 = vld [vmem:[#allocation5 + $0x80] sm:$0xff]
        %v299 = vld [vmem:[#allocation5 + $0x88] sm:$0xff]
        %v300 = vld [vmem:[#allocation5 + $0x90] sm:$0xff]
        %v301 = vld [vmem:[#allocation5 + $0x98] sm:$0xff]
        %v302 = vld [vmem:[#allocation5 + $0xa0] sm:$0xff]
        %v303 = vld [vmem:[#allocation5 + $0xa8] sm:$0xff]
        %v304 = vld [vmem:[#allocation5 + $0xb0] sm:$0xff]
        %v305 = vld [vmem:[#allocation5 + $0xb8] sm:$0xff]
        %v306 = vld [vmem:[#allocation5 + $0xc0] sm:$0xff]
        %v307 = vld [vmem:[#allocation5 + $0xc8] sm:$0xff]
        %v308 = vld [vmem:[#allocation5 + $0xd0] sm:$0xff]
        %v309 = vld [vmem:[#allocation5 + $0xd8] sm:$0xff]
        %v310 = vld [vmem:[#allocation5 + $0xe0] sm:$0xff]
        %v311 = vld [vmem:[#allocation5 + $0xe8] sm:$0xff]
        %v312 = vld [vmem:[#allocation5 + $0xf0] sm:$0xff]
        %v313 = vld [vmem:[#allocation5 + $0xf8] sm:$0xff]
        %v314 = vld [vmem:[#allocation5 + $0x100] sm:$0xff]
        %v315 = vld [vmem:[#allocation5 + $0x108] sm:$0xff]
        %v316 = vld [vmem:[#allocation5 + $0x110] sm:$0xff]
        %v317 = vld [vmem:[#allocation5 + $0x118] sm:$0xff]
        %v318 = vld [vmem:[#allocation5 + $0x120] sm:$0xff]
        %v319 = vld [vmem:[#allocation5 + $0x128] sm:$0xff]
        %v320 = vld [vmem:[#allocation5 + $0x130] sm:$0xff]
        %v321 = vld [vmem:[#allocation5 + $0x138] sm:$0xff]
        %v322 = vld [vmem:[#allocation5 + $0x140] sm:$0xff]
        %v323 = vld [vmem:[#allocation5 + $0x148] sm:$0xff]
        %v324 = vld [vmem:[#allocation5 + $0x150] sm:$0xff]
        %v325 = vld [vmem:[#allocation5 + $0x158] sm:$0xff]
        %v326 = vld [vmem:[#allocation5 + $0x160] sm:$0xff]
        %v327 = vld [vmem:[#allocation5 + $0x168] sm:$0xff]
        %v328 = vld [vmem:[#allocation5 + $0x170] sm:$0xff]
        %v329 = vld [vmem:[#allocation5 + $0x178] sm:$0xff]
        %v330 = vld [vmem:[#allocation5 + $0x180] sm:$0xff]
        %v331 = vld [vmem:[#allocation5 + $0x188] sm:$0xff]
        %v332 = vld [vmem:[#allocation5 + $0x190] sm:$0xff]
        %v333 = vld [vmem:[#allocation5 + $0x198] sm:$0xff]
        %v334 = vld [vmem:[#allocation5 + $0x1a0] sm:$0xff]
        %v335 = vld [vmem:[#allocation5 + $0x1a8] sm:$0xff]
        %v336 = vld [vmem:[#allocation5 + $0x1b0] sm:$0xff]
        %v337 = vld [vmem:[#allocation5 + $0x1b8] sm:$0xff]
        %v338 = vld [vmem:[#allocation5 + $0x1c0] sm:$0xff]
        %v339 = vld [vmem:[#allocation5 + $0x1c8] sm:$0xff]
        %v340 = vld [vmem:[#allocation5 + $0x1d0] sm:$0xff]
        %v341 = vld [vmem:[#allocation5 + $0x1d8] sm:$0xff]
        %v342 = vld [vmem:[#allocation5 + $0x1e0] sm:$0xff]
        %v343 = vld [vmem:[#allocation5 + $0x1e8] sm:$0xff]
        %v344 = vld [vmem:[#allocation5 + $0x1f0] sm:$0xff]
        %v345 = vld [vmem:[#allocation5 + $0x1f8] sm:$0xff]
        %v346 = vld [vmem:[#allocation5 + $0x200] sm:$0xff]
        %v347 = vld [vmem:[#allocation5 + $0x208] sm:$0xff]
        %v348 = vld [vmem:[#allocation5 + $0x210] sm:$0xff]
        %v349 = vld [vmem:[#allocation5 + $0x218] sm:$0xff]
        %v350 = vld [vmem:[#allocation5 + $0x220] sm:$0xff]
        %v351 = vld [vmem:[#allocation5 + $0x228] sm:$0xff]
        %v352 = vld [vmem:[#allocation5 + $0x230] sm:$0xff]
        %v353 = vld [vmem:[#allocation5 + $0x238] sm:$0xff]
        %v354 = vld [vmem:[#allocation5 + $0x240] sm:$0xff]
        %v355 = vld [vmem:[#allocation5 + $0x248] sm:$0xff]
        %v356 = vld [vmem:[#allocation5 + $0x250] sm:$0xff]
        %v357 = vld [vmem:[#allocation5 + $0x258] sm:$0xff]
        %v358 = vld [vmem:[#allocation5 + $0x260] sm:$0xff]
        %v359 = vld [vmem:[#allocation5 + $0x268] sm:$0xff]
        %v360 = vld [vmem:[#allocation5 + $0x270] sm:$0xff]
        %v361 = vld [vmem:[#allocation5 + $0x278] sm:$0xff]
        %v362 = vld [vmem:[#allocation5 + $0x280] sm:$0xff]
        %v363 = vld [vmem:[#allocation5 + $0x288] sm:$0xff]
        %v364 = vld [vmem:[#allocation5 + $0x290] sm:$0xff]
        %v365 = vld [vmem:[#allocation5 + $0x298] sm:$0xff]
        %v366 = vld [vmem:[#allocation5 + $0x2a0] sm:$0xff]
        %v367 = vld [vmem:[#allocation5 + $0x2a8] sm:$0xff]
        %v368 = vld [vmem:[#allocation5 + $0x2b0] sm:$0xff]
        %v369 = vld [vmem:[#allocation5 + $0x2b8] sm:$0xff]
        %v370 = vld [vmem:[#allocation5 + $0x2c0] sm:$0xff]
        %v371 = vld [vmem:[#allocation5 + $0x2c8] sm:$0xff]
        %v372 = vld [vmem:[#allocation5 + $0x2d0] sm:$0xff]
        %v373 = vld [vmem:[#allocation5 + $0x2d8] sm:$0xff]
        %v374 = vld [vmem:[#allocation5 + $0x2e0] sm:$0xff]
        %v375 = vld [vmem:[#allocation5 + $0x2e8] sm:$0xff]
        %v376 = vld [vmem:[#allocation5 + $0x2f0] sm:$0xff]
        %v377 = vld [vmem:[#allocation5 + $0x2f8] sm:$0xff]
        %v378 = vld [vmem:[#allocation5 + $0x300] sm:$0xff]
        %v379 = vld [vmem:[#allocation5 + $0x308] sm:$0xff]
        %v380 = vld [vmem:[#allocation5 + $0x310] sm:$0xff]
        %v381 = vld [vmem:[#allocation5 + $0x318] sm:$0xff]
        %v382 = vld [vmem:[#allocation5 + $0x320] sm:$0xff]
        %v383 = vld [vmem:[#allocation5 + $0x328] sm:$0xff]
        %v384 = vld [vmem:[#allocation5 + $0x330] sm:$0xff]
        %v385 = vld [vmem:[#allocation5 + $0x338] sm:$0xff]
        %v386 = vld [vmem:[#allocation5 + $0x340] sm:$0xff]
        %v387 = vld [vmem:[#allocation5 + $0x348] sm:$0xff]
        %v388 = vld [vmem:[#allocation5 + $0x350] sm:$0xff]
        %v389 = vld [vmem:[#allocation5 + $0x358] sm:$0xff]
        %v390 = vld [vmem:[#allocation5 + $0x360] sm:$0xff]
        %v391 = vld [vmem:[#allocation5 + $0x368] sm:$0xff]
        %v392 = vld [vmem:[#allocation5 + $0x370] sm:$0xff]
        %v393 = vld [vmem:[#allocation5 + $0x378] sm:$0xff]
        %v394 = vld [vmem:[#allocation5 + $0x380] sm:$0xff]
        %v395 = vld [vmem:[#allocation5 + $0x388] sm:$0xff]
        %v396 = vld [vmem:[#allocation5 + $0x390] sm:$0xff]
        %v397 = vld [vmem:[#allocation5 + $0x398] sm:$0xff]
        %v398 = vld [vmem:[#allocation5 + $0x3a0] sm:$0xff]
        %v399 = vld [vmem:[#allocation5 + $0x3a8] sm:$0xff]
        %v400 = vld [vmem:[#allocation5 + $0x3b0] sm:$0xff]
        %v401 = vld [vmem:[#allocation5 + $0x3b8] sm:$0xff]
        %v402 = vld [vmem:[#allocation5 + $0x3c0] sm:$0xff]
        %v403 = vld [vmem:[#allocation5 + $0x3c8] sm:$0xff]
        %v404 = vld [vmem:[#allocation5 + $0x3d0] sm:$0xff]
        %v405 = vld [vmem:[#allocation5 + $0x3d8] sm:$0xff]
        %v406 = vld [vmem:[#allocation5 + $0x3e0] sm:$0xff]
        %v407 = vld [vmem:[#allocation5 + $0x3e8] sm:$0xff]
        %v408 = vld [vmem:[#allocation5 + $0x3f0] sm:$0xff]
        %v409 = vld [vmem:[#allocation5 + $0x3f8] sm:$0xff]
        %v410 = vld [vmem:[#allocation5 + $0x400] sm:$0xff]
        %v411 = vld [vmem:[#allocation5 + $0x408] sm:$0xff]
        %v412 = vld [vmem:[#allocation5 + $0x410] sm:$0xff]
        %v413 = vld [vmem:[#allocation5 + $0x418] sm:$0xff]
        %v414 = vld [vmem:[#allocation5 + $0x420] sm:$0xff]
        %v415 = vld [vmem:[#allocation5 + $0x428] sm:$0xff]
        %v416 = vld [vmem:[#allocation5 + $0x430] sm:$0xff]
        %v417 = vld [vmem:[#allocation5 + $0x438] sm:$0xff]
        %v418 = vld [vmem:[#allocation5 + $0x440] sm:$0xff]
        %v419 = vld [vmem:[#allocation5 + $0x448] sm:$0xff]
        %v420 = vld [vmem:[#allocation5 + $0x450] sm:$0xff]
        %v421 = vld [vmem:[#allocation5 + $0x458] sm:$0xff]
        %v422 = vld [vmem:[#allocation5 + $0x460] sm:$0xff]
        %v423 = vld [vmem:[#allocation5 + $0x468] sm:$0xff]
        %v424 = vld [vmem:[#allocation5 + $0x470] sm:$0xff]
        %v425 = vld [vmem:[#allocation5 + $0x478] sm:$0xff]
        %v426 = vld [vmem:[#allocation5 + $0x480] sm:$0xff]
        %v427 = vld [vmem:[#allocation5 + $0x488] sm:$0xff]
        %v428 = vld [vmem:[#allocation5 + $0x490] sm:$0xff]
        %v429 = vld [vmem:[#allocation5 + $0x498] sm:$0xff]
        %v430 = vld [vmem:[#allocation5 + $0x4a0] sm:$0xff]
        %v431 = vld [vmem:[#allocation5 + $0x4a8] sm:$0xff]
        %v432 = vld [vmem:[#allocation5 + $0x4b0] sm:$0xff]
        %v433 = vld [vmem:[#allocation5 + $0x4b8] sm:$0xff]
        %v434 = vld [vmem:[#allocation5 + $0x4c0] sm:$0xff]
        %v435 = vld [vmem:[#allocation5 + $0x4c8] sm:$0xff]
        %v436 = vld [vmem:[#allocation5 + $0x4d0] sm:$0xff]
        %v437 = vld [vmem:[#allocation5 + $0x4d8] sm:$0xff]
        %v438 = vld [vmem:[#allocation5 + $0x4e0] sm:$0xff]
        %v439 = vld [vmem:[#allocation5 + $0x4e8] sm:$0xff]
        %v440 = vld [vmem:[#allocation5 + $0x4f0] sm:$0xff]
        %v441 = vld [vmem:[#allocation5 + $0x4f8] sm:$0xff]
        %v442 = vld [vmem:[#allocation5 + $0x500] sm:$0xff]
        %v443 = vld [vmem:[#allocation5 + $0x508] sm:$0xff]
        %v444 = vld [vmem:[#allocation5 + $0x510] sm:$0xff]
        %v445 = vld [vmem:[#allocation5 + $0x518] sm:$0xff]
        %v446 = vld [vmem:[#allocation5 + $0x520] sm:$0xff]
        %v447 = vld [vmem:[#allocation5 + $0x528] sm:$0xff]
        %v448 = vld [vmem:[#allocation5 + $0x530] sm:$0xff]
        %v449 = vld [vmem:[#allocation5 + $0x538] sm:$0xff]
        %v450 = vld [vmem:[#allocation5 + $0x540] sm:$0xff]
        %v451 = vld [vmem:[#allocation5 + $0x548] sm:$0xff]
        %v452 = vld [vmem:[#allocation5 + $0x550] sm:$0xff]
        %v453 = vld [vmem:[#allocation5 + $0x558] sm:$0xff]
        %v454 = vld [vmem:[#allocation5 + $0x560] sm:$0xff]
        %v455 = vld [vmem:[#allocation5 + $0x568] sm:$0xff]
        %v456 = vld [vmem:[#allocation5 + $0x570] sm:$0xff]
        %v457 = vld [vmem:[#allocation5 + $0x578] sm:$0xff]
        %v458 = vld [vmem:[#allocation5 + $0x580] sm:$0xff]
        %v459 = vld [vmem:[#allocation5 + $0x588] sm:$0xff]
        %v460 = vld [vmem:[#allocation5 + $0x590] sm:$0xff]
        %v461 = vld [vmem:[#allocation5 + $0x598] sm:$0xff]
        %v462 = vld [vmem:[#allocation5 + $0x5a0] sm:$0xff]
        %v463 = vld [vmem:[#allocation5 + $0x5a8] sm:$0xff]
        %v464 = vld [vmem:[#allocation5 + $0x5b0] sm:$0xff]
        %v465 = vld [vmem:[#allocation5 + $0x5b8] sm:$0xff]
        %v466 = vld [vmem:[#allocation5 + $0x5c0] sm:$0xff]
        %v467 = vld [vmem:[#allocation5 + $0x5c8] sm:$0xff]
        %v468 = vld [vmem:[#allocation5 + $0x5d0] sm:$0xff]
        %v469 = vld [vmem:[#allocation5 + $0x5d8] sm:$0xff]
        %v470 = vld [vmem:[#allocation5 + $0x5e0] sm:$0xff]
        %v471 = vld [vmem:[#allocation5 + $0x5e8] sm:$0xff]
        %v472 = vld [vmem:[#allocation5 + $0x5f0] sm:$0xff]
        %v473 = vld [vmem:[#allocation5 + $0x5f8] sm:$0xff]
        %v474 = vld [vmem:[#allocation5 + $0x600] sm:$0xff]
        %v475 = vld [vmem:[#allocation5 + $0x608] sm:$0xff]
        %v476 = vld [vmem:[#allocation5 + $0x610] sm:$0xff]
        %v477 = vld [vmem:[#allocation5 + $0x618] sm:$0xff]
        %v478 = vld [vmem:[#allocation5 + $0x620] sm:$0xff]
        %v479 = vld [vmem:[#allocation5 + $0x628] sm:$0xff]
        %v480 = vld [vmem:[#allocation5 + $0x630] sm:$0xff]
        %v481 = vld [vmem:[#allocation5 + $0x638] sm:$0xff]
        %v482 = vld [vmem:[#allocation5 + $0x640] sm:$0xff]
        %v483 = vld [vmem:[#allocation5 + $0x648] sm:$0xff]
        %v484 = vld [vmem:[#allocation5 + $0x650] sm:$0xff]
        %v485 = vld [vmem:[#allocation5 + $0x658] sm:$0xff]
        %v486 = vld [vmem:[#allocation5 + $0x660] sm:$0xff]
        %v487 = vld [vmem:[#allocation5 + $0x668] sm:$0xff]
        %v488 = vld [vmem:[#allocation5 + $0x670] sm:$0xff]
        %v489 = vld [vmem:[#allocation5 + $0x678] sm:$0xff]
        %v490 = vld [vmem:[#allocation5 + $0x680] sm:$0xff]
        %v491 = vld [vmem:[#allocation5 + $0x688] sm:$0xff]
        %v492 = vld [vmem:[#allocation5 + $0x690] sm:$0xff]
        %v493 = vld [vmem:[#allocation5 + $0x698] sm:$0xff]
        %v494 = vld [vmem:[#allocation5 + $0x6a0] sm:$0xff]
        %v495 = vld [vmem:[#allocation5 + $0x6a8] sm:$0xff]
        %v496 = vld [vmem:[#allocation5 + $0x6b0] sm:$0xff]
        %v497 = vld [vmem:[#allocation5 + $0x6b8] sm:$0xff]
        %v498 = vld [vmem:[#allocation5 + $0x6c0] sm:$0xff]
        %v499 = vld [vmem:[#allocation5 + $0x6c8] sm:$0xff]
        %v500 = vld [vmem:[#allocation5 + $0x6d0] sm:$0xff]
        %v501 = vld [vmem:[#allocation5 + $0x6d8] sm:$0xff]
        %v502 = vld [vmem:[#allocation5 + $0x6e0] sm:$0xff]
        %v503 = vld [vmem:[#allocation5 + $0x6e8] sm:$0xff]
        %v504 = vld [vmem:[#allocation5 + $0x6f0] sm:$0xff]
        %v505 = vld [vmem:[#allocation5 + $0x6f8] sm:$0xff]
        %v506 = vld [vmem:[#allocation5 + $0x700] sm:$0xff]
        %v507 = vld [vmem:[#allocation5 + $0x708] sm:$0xff]
        %v508 = vld [vmem:[#allocation5 + $0x710] sm:$0xff]
        %v509 = vld [vmem:[#allocation5 + $0x718] sm:$0xff]
        %v510 = vld [vmem:[#allocation5 + $0x720] sm:$0xff]
        %v511 = vld [vmem:[#allocation5 + $0x728] sm:$0xff]
        %v512 = vld [vmem:[#allocation5 + $0x730] sm:$0xff]
        %v513 = vld [vmem:[#allocation5 + $0x738] sm:$0xff]
        %v514 = vld [vmem:[#allocation5 + $0x740] sm:$0xff]
        %v515 = vld [vmem:[#allocation5 + $0x748] sm:$0xff]
        %v516 = vld [vmem:[#allocation5 + $0x750] sm:$0xff]
        %v517 = vld [vmem:[#allocation5 + $0x758] sm:$0xff]
        %v518 = vld [vmem:[#allocation5 + $0x760] sm:$0xff]
        %v519 = vld [vmem:[#allocation5 + $0x768] sm:$0xff]
        %v520 = vld [vmem:[#allocation5 + $0x770] sm:$0xff]
        %v521 = vld [vmem:[#allocation5 + $0x778] sm:$0xff]
        %v522 = vld [vmem:[#allocation5 + $0x780] sm:$0xff]
        %v523 = vld [vmem:[#allocation5 + $0x788] sm:$0xff]
        %v524 = vld [vmem:[#allocation5 + $0x790] sm:$0xff]
        %v525 = vld [vmem:[#allocation5 + $0x798] sm:$0xff]
        %v526 = vld [vmem:[#allocation5 + $0x7a0] sm:$0xff]
        %v527 = vld [vmem:[#allocation5 + $0x7a8] sm:$0xff]
        %v528 = vld [vmem:[#allocation5 + $0x7b0] sm:$0xff]
        %v529 = vld [vmem:[#allocation5 + $0x7b8] sm:$0xff]
        %v530 = vld [vmem:[#allocation5 + $0x7c0] sm:$0xff]
        %v531 = vld [vmem:[#allocation5 + $0x7c8] sm:$0xff]
        %v532 = vld [vmem:[#allocation5 + $0x7d0] sm:$0xff]
        %v533 = vld [vmem:[#allocation5 + $0x7d8] sm:$0xff]
        %v534 = vld [vmem:[#allocation5 + $0x7e0] sm:$0xff]
        %v535 = vld [vmem:[#allocation5 + $0x7e8] sm:$0xff]
        %v536 = vld [vmem:[#allocation5 + $0x7f0] sm:$0xff]
        %v537 = vld [vmem:[#allocation5 + $0x7f8] sm:$0xff]
        %v794 = vunpack.c.l.b16 %v282
        %v795 = vunpack.c.h.b16 %v282
        %v796 = vunpack.c.l.b16 %v283
        %v797 = vunpack.c.h.b16 %v283
        %v798 = vunpack.c.l.b16 %v284
        %v799 = vunpack.c.h.b16 %v284
        %v800 = vunpack.c.l.b16 %v285
        %v801 = vunpack.c.h.b16 %v285
        %v802 = vunpack.c.l.b16 %v286
        %v803 = vunpack.c.h.b16 %v286
        %v804 = vunpack.c.l.b16 %v287
        %v805 = vunpack.c.h.b16 %v287
        %v806 = vunpack.c.l.b16 %v288
        %v807 = vunpack.c.h.b16 %v288
        %v808 = vunpack.c.l.b16 %v289
        %v809 = vunpack.c.h.b16 %v289
        %v810 = vunpack.c.l.b16 %v290
        %v811 = vunpack.c.h.b16 %v290
        %v812 = vunpack.c.l.b16 %v291
        %v813 = vunpack.c.h.b16 %v291
        %v814 = vunpack.c.l.b16 %v292
        %v815 = vunpack.c.h.b16 %v292
        %v816 = vunpack.c.l.b16 %v293
        %v817 = vunpack.c.h.b16 %v293
        %v818 = vunpack.c.l.b16 %v294
        %v819 = vunpack.c.h.b16 %v294
        %v820 = vunpack.c.l.b16 %v295
        %v821 = vunpack.c.h.b16 %v295
        %v822 = vunpack.c.l.b16 %v296
        %v823 = vunpack.c.h.b16 %v296
        %v824 = vunpack.c.l.b16 %v297
        %v825 = vunpack.c.h.b16 %v297
        %v826 = vunpack.c.l.b16 %v298
        %v827 = vunpack.c.h.b16 %v298
        %v828 = vunpack.c.l.b16 %v299
        %v829 = vunpack.c.h.b16 %v299
        %v830 = vunpack.c.l.b16 %v300
        %v831 = vunpack.c.h.b16 %v300
        %v832 = vunpack.c.l.b16 %v301
        %v833 = vunpack.c.h.b16 %v301
        %v834 = vunpack.c.l.b16 %v302
        %v835 = vunpack.c.h.b16 %v302
        %v836 = vunpack.c.l.b16 %v303
        %v837 = vunpack.c.h.b16 %v303
        %v838 = vunpack.c.l.b16 %v304
        %v839 = vunpack.c.h.b16 %v304
        %v840 = vunpack.c.l.b16 %v305
        %v841 = vunpack.c.h.b16 %v305
        %v842 = vunpack.c.l.b16 %v306
        %v843 = vunpack.c.h.b16 %v306
        %v844 = vunpack.c.l.b16 %v307
        %v845 = vunpack.c.h.b16 %v307
        %v846 = vunpack.c.l.b16 %v308
        %v847 = vunpack.c.h.b16 %v308
        %v848 = vunpack.c.l.b16 %v309
        %v849 = vunpack.c.h.b16 %v309
        %v850 = vunpack.c.l.b16 %v310
        %v851 = vunpack.c.h.b16 %v310
        %v852 = vunpack.c.l.b16 %v311
        %v853 = vunpack.c.h.b16 %v311
        %v854 = vunpack.c.l.b16 %v312
        %v855 = vunpack.c.h.b16 %v312
        %v856 = vunpack.c.l.b16 %v313
        %v857 = vunpack.c.h.b16 %v313
        %v858 = vunpack.c.l.b16 %v314
        %v859 = vunpack.c.h.b16 %v314
        %v860 = vunpack.c.l.b16 %v315
        %v861 = vunpack.c.h.b16 %v315
        %v862 = vunpack.c.l.b16 %v316
        %v863 = vunpack.c.h.b16 %v316
        %v864 = vunpack.c.l.b16 %v317
        %v865 = vunpack.c.h.b16 %v317
        %v866 = vunpack.c.l.b16 %v318
        %v867 = vunpack.c.h.b16 %v318
        %v868 = vunpack.c.l.b16 %v319
        %v869 = vunpack.c.h.b16 %v319
        %v870 = vunpack.c.l.b16 %v320
        %v871 = vunpack.c.h.b16 %v320
        %v872 = vunpack.c.l.b16 %v321
        %v873 = vunpack.c.h.b16 %v321
        %v874 = vunpack.c.l.b16 %v322
        %v875 = vunpack.c.h.b16 %v322
        %v876 = vunpack.c.l.b16 %v323
        %v877 = vunpack.c.h.b16 %v323
        %v878 = vunpack.c.l.b16 %v324
        %v879 = vunpack.c.h.b16 %v324
        %v880 = vunpack.c.l.b16 %v325
        %v881 = vunpack.c.h.b16 %v325
        %v882 = vunpack.c.l.b16 %v326
        %v883 = vunpack.c.h.b16 %v326
        %v884 = vunpack.c.l.b16 %v327
        %v885 = vunpack.c.h.b16 %v327
        %v886 = vunpack.c.l.b16 %v328
        %v887 = vunpack.c.h.b16 %v328
        %v888 = vunpack.c.l.b16 %v329
        %v889 = vunpack.c.h.b16 %v329
        %v890 = vunpack.c.l.b16 %v330
        %v891 = vunpack.c.h.b16 %v330
        %v892 = vunpack.c.l.b16 %v331
        %v893 = vunpack.c.h.b16 %v331
        %v894 = vunpack.c.l.b16 %v332
        %v895 = vunpack.c.h.b16 %v332
        %v896 = vunpack.c.l.b16 %v333
        %v897 = vunpack.c.h.b16 %v333
        %v898 = vunpack.c.l.b16 %v334
        %v899 = vunpack.c.h.b16 %v334
        %v900 = vunpack.c.l.b16 %v335
        %v901 = vunpack.c.h.b16 %v335
        %v902 = vunpack.c.l.b16 %v336
        %v903 = vunpack.c.h.b16 %v336
        %v904 = vunpack.c.l.b16 %v337
        %v905 = vunpack.c.h.b16 %v337
        %v906 = vunpack.c.l.b16 %v338
        %v907 = vunpack.c.h.b16 %v338
        %v908 = vunpack.c.l.b16 %v339
        %v909 = vunpack.c.h.b16 %v339
        %v910 = vunpack.c.l.b16 %v340
        %v911 = vunpack.c.h.b16 %v340
        %v912 = vunpack.c.l.b16 %v341
        %v913 = vunpack.c.h.b16 %v341
        %v914 = vunpack.c.l.b16 %v342
        %v915 = vunpack.c.h.b16 %v342
        %v916 = vunpack.c.l.b16 %v343
        %v917 = vunpack.c.h.b16 %v343
        %v918 = vunpack.c.l.b16 %v344
        %v919 = vunpack.c.h.b16 %v344
        %v920 = vunpack.c.l.b16 %v345
        %v921 = vunpack.c.h.b16 %v345
        %v922 = vunpack.c.l.b16 %v346
        %v923 = vunpack.c.h.b16 %v346
        %v924 = vunpack.c.l.b16 %v347
        %v925 = vunpack.c.h.b16 %v347
        %v926 = vunpack.c.l.b16 %v348
        %v927 = vunpack.c.h.b16 %v348
        %v928 = vunpack.c.l.b16 %v349
        %v929 = vunpack.c.h.b16 %v349
        %v930 = vunpack.c.l.b16 %v350
        %v931 = vunpack.c.h.b16 %v350
        %v932 = vunpack.c.l.b16 %v351
        %v933 = vunpack.c.h.b16 %v351
        %v934 = vunpack.c.l.b16 %v352
        %v935 = vunpack.c.h.b16 %v352
        %v936 = vunpack.c.l.b16 %v353
        %v937 = vunpack.c.h.b16 %v353
        %v938 = vunpack.c.l.b16 %v354
        %v939 = vunpack.c.h.b16 %v354
        %v940 = vunpack.c.l.b16 %v355
        %v941 = vunpack.c.h.b16 %v355
        %v942 = vunpack.c.l.b16 %v356
        %v943 = vunpack.c.h.b16 %v356
        %v944 = vunpack.c.l.b16 %v357
        %v945 = vunpack.c.h.b16 %v357
        %v946 = vunpack.c.l.b16 %v358
        %v947 = vunpack.c.h.b16 %v358
        %v948 = vunpack.c.l.b16 %v359
        %v949 = vunpack.c.h.b16 %v359
        %v950 = vunpack.c.l.b16 %v360
        %v951 = vunpack.c.h.b16 %v360
        %v952 = vunpack.c.l.b16 %v361
        %v953 = vunpack.c.h.b16 %v361
        %v954 = vunpack.c.l.b16 %v362
        %v955 = vunpack.c.h.b16 %v362
        %v956 = vunpack.c.l.b16 %v363
        %v957 = vunpack.c.h.b16 %v363
        %v958 = vunpack.c.l.b16 %v364
        %v959 = vunpack.c.h.b16 %v364
        %v960 = vunpack.c.l.b16 %v365
        %v961 = vunpack.c.h.b16 %v365
        %v962 = vunpack.c.l.b16 %v366
        %v963 = vunpack.c.h.b16 %v366
        %v964 = vunpack.c.l.b16 %v367
        %v965 = vunpack.c.h.b16 %v367
        %v966 = vunpack.c.l.b16 %v368
        %v967 = vunpack.c.h.b16 %v368
        %v968 = vunpack.c.l.b16 %v369
        %v969 = vunpack.c.h.b16 %v369
        %v970 = vunpack.c.l.b16 %v370
        %v971 = vunpack.c.h.b16 %v370
        %v972 = vunpack.c.l.b16 %v371
        %v973 = vunpack.c.h.b16 %v371
        %v974 = vunpack.c.l.b16 %v372
        %v975 = vunpack.c.h.b16 %v372
        %v976 = vunpack.c.l.b16 %v373
        %v977 = vunpack.c.h.b16 %v373
        %v978 = vunpack.c.l.b16 %v374
        %v979 = vunpack.c.h.b16 %v374
        %v980 = vunpack.c.l.b16 %v375
        %v981 = vunpack.c.h.b16 %v375
        %v982 = vunpack.c.l.b16 %v376
        %v983 = vunpack.c.h.b16 %v376
        %v984 = vunpack.c.l.b16 %v377
        %v985 = vunpack.c.h.b16 %v377
        %v986 = vunpack.c.l.b16 %v378
        %v987 = vunpack.c.h.b16 %v378
        %v988 = vunpack.c.l.b16 %v379
        %v989 = vunpack.c.h.b16 %v379
        %v990 = vunpack.c.l.b16 %v380
        %v991 = vunpack.c.h.b16 %v380
        %v992 = vunpack.c.l.b16 %v381
        %v993 = vunpack.c.h.b16 %v381
        %v994 = vunpack.c.l.b16 %v382
        %v995 = vunpack.c.h.b16 %v382
        %v996 = vunpack.c.l.b16 %v383
        %v997 = vunpack.c.h.b16 %v383
        %v998 = vunpack.c.l.b16 %v384
        %v999 = vunpack.c.h.b16 %v384
        %v1000 = vunpack.c.l.b16 %v385
        %v1001 = vunpack.c.h.b16 %v385
        %v1002 = vunpack.c.l.b16 %v386
        %v1003 = vunpack.c.h.b16 %v386
        %v1004 = vunpack.c.l.b16 %v387
        %v1005 = vunpack.c.h.b16 %v387
        %v1006 = vunpack.c.l.b16 %v388
        %v1007 = vunpack.c.h.b16 %v388
        %v1008 = vunpack.c.l.b16 %v389
        %v1009 = vunpack.c.h.b16 %v389
        %v1010 = vunpack.c.l.b16 %v390
        %v1011 = vunpack.c.h.b16 %v390
        %v1012 = vunpack.c.l.b16 %v391
        %v1013 = vunpack.c.h.b16 %v391
        %v1014 = vunpack.c.l.b16 %v392
        %v1015 = vunpack.c.h.b16 %v392
        %v1016 = vunpack.c.l.b16 %v393
        %v1017 = vunpack.c.h.b16 %v393
        %v1018 = vunpack.c.l.b16 %v394
        %v1019 = vunpack.c.h.b16 %v394
        %v1020 = vunpack.c.l.b16 %v395
        %v1021 = vunpack.c.h.b16 %v395
        %v1022 = vunpack.c.l.b16 %v396
        %v1023 = vunpack.c.h.b16 %v396
        %v1024 = vunpack.c.l.b16 %v397
        %v1025 = vunpack.c.h.b16 %v397
        %v1026 = vunpack.c.l.b16 %v398
        %v1027 = vunpack.c.h.b16 %v398
        %v1028 = vunpack.c.l.b16 %v399
        %v1029 = vunpack.c.h.b16 %v399
        %v1030 = vunpack.c.l.b16 %v400
        %v1031 = vunpack.c.h.b16 %v400
        %v1032 = vunpack.c.l.b16 %v401
        %v1033 = vunpack.c.h.b16 %v401
        %v1034 = vunpack.c.l.b16 %v402
        %v1035 = vunpack.c.h.b16 %v402
        %v1036 = vunpack.c.l.b16 %v403
        %v1037 = vunpack.c.h.b16 %v403
        %v1038 = vunpack.c.l.b16 %v404
        %v1039 = vunpack.c.h.b16 %v404
        %v1040 = vunpack.c.l.b16 %v405
        %v1041 = vunpack.c.h.b16 %v405
        %v1042 = vunpack.c.l.b16 %v406
        %v1043 = vunpack.c.h.b16 %v406
        %v1044 = vunpack.c.l.b16 %v407
        %v1045 = vunpack.c.h.b16 %v407
        %v1046 = vunpack.c.l.b16 %v408
        %v1047 = vunpack.c.h.b16 %v408
        %v1048 = vunpack.c.l.b16 %v409
        %v1049 = vunpack.c.h.b16 %v409
        %v1050 = vunpack.c.l.b16 %v410
        %v1051 = vunpack.c.h.b16 %v410
        %v1052 = vunpack.c.l.b16 %v411
        %v1053 = vunpack.c.h.b16 %v411
        %v1054 = vunpack.c.l.b16 %v412
        %v1055 = vunpack.c.h.b16 %v412
        %v1056 = vunpack.c.l.b16 %v413
        %v1057 = vunpack.c.h.b16 %v413
        %v1058 = vunpack.c.l.b16 %v414
        %v1059 = vunpack.c.h.b16 %v414
        %v1060 = vunpack.c.l.b16 %v415
        %v1061 = vunpack.c.h.b16 %v415
        %v1062 = vunpack.c.l.b16 %v416
        %v1063 = vunpack.c.h.b16 %v416
        %v1064 = vunpack.c.l.b16 %v417
        %v1065 = vunpack.c.h.b16 %v417
        %v1066 = vunpack.c.l.b16 %v418
        %v1067 = vunpack.c.h.b16 %v418
        %v1068 = vunpack.c.l.b16 %v419
        %v1069 = vunpack.c.h.b16 %v419
        %v1070 = vunpack.c.l.b16 %v420
        %v1071 = vunpack.c.h.b16 %v420
        %v1072 = vunpack.c.l.b16 %v421
        %v1073 = vunpack.c.h.b16 %v421
        %v1074 = vunpack.c.l.b16 %v422
        %v1075 = vunpack.c.h.b16 %v422
        %v1076 = vunpack.c.l.b16 %v423
        %v1077 = vunpack.c.h.b16 %v423
        %v1078 = vunpack.c.l.b16 %v424
        %v1079 = vunpack.c.h.b16 %v424
        %v1080 = vunpack.c.l.b16 %v425
        %v1081 = vunpack.c.h.b16 %v425
        %v1082 = vunpack.c.l.b16 %v426
        %v1083 = vunpack.c.h.b16 %v426
        %v1084 = vunpack.c.l.b16 %v427
        %v1085 = vunpack.c.h.b16 %v427
        %v1086 = vunpack.c.l.b16 %v428
        %v1087 = vunpack.c.h.b16 %v428
        %v1088 = vunpack.c.l.b16 %v429
        %v1089 = vunpack.c.h.b16 %v429
        %v1090 = vunpack.c.l.b16 %v430
        %v1091 = vunpack.c.h.b16 %v430
        %v1092 = vunpack.c.l.b16 %v431
        %v1093 = vunpack.c.h.b16 %v431
        %v1094 = vunpack.c.l.b16 %v432
        %v1095 = vunpack.c.h.b16 %v432
        %v1096 = vunpack.c.l.b16 %v433
        %v1097 = vunpack.c.h.b16 %v433
        %v1098 = vunpack.c.l.b16 %v434
        %v1099 = vunpack.c.h.b16 %v434
        %v1100 = vunpack.c.l.b16 %v435
        %v1101 = vunpack.c.h.b16 %v435
        %v1102 = vunpack.c.l.b16 %v436
        %v1103 = vunpack.c.h.b16 %v436
        %v1104 = vunpack.c.l.b16 %v437
        %v1105 = vunpack.c.h.b16 %v437
        %v1106 = vunpack.c.l.b16 %v438
        %v1107 = vunpack.c.h.b16 %v438
        %v1108 = vunpack.c.l.b16 %v439
        %v1109 = vunpack.c.h.b16 %v439
        %v1110 = vunpack.c.l.b16 %v440
        %v1111 = vunpack.c.h.b16 %v440
        %v1112 = vunpack.c.l.b16 %v441
        %v1113 = vunpack.c.h.b16 %v441
        %v1114 = vunpack.c.l.b16 %v442
        %v1115 = vunpack.c.h.b16 %v442
        %v1116 = vunpack.c.l.b16 %v443
        %v1117 = vunpack.c.h.b16 %v443
        %v1118 = vunpack.c.l.b16 %v444
        %v1119 = vunpack.c.h.b16 %v444
        %v1120 = vunpack.c.l.b16 %v445
        %v1121 = vunpack.c.h.b16 %v445
        %v1122 = vunpack.c.l.b16 %v446
        %v1123 = vunpack.c.h.b16 %v446
        %v1124 = vunpack.c.l.b16 %v447
        %v1125 = vunpack.c.h.b16 %v447
        %v1126 = vunpack.c.l.b16 %v448
        %v1127 = vunpack.c.h.b16 %v448
        %v1128 = vunpack.c.l.b16 %v449
        %v1129 = vunpack.c.h.b16 %v449
        %v1130 = vunpack.c.l.b16 %v450
        %v1131 = vunpack.c.h.b16 %v450
        %v1132 = vunpack.c.l.b16 %v451
        %v1133 = vunpack.c.h.b16 %v451
        %v1134 = vunpack.c.l.b16 %v452
        %v1135 = vunpack.c.h.b16 %v452
        %v1136 = vunpack.c.l.b16 %v453
        %v1137 = vunpack.c.h.b16 %v453
        %v1138 = vunpack.c.l.b16 %v454
        %v1139 = vunpack.c.h.b16 %v454
        %v1140 = vunpack.c.l.b16 %v455
        %v1141 = vunpack.c.h.b16 %v455
        %v1142 = vunpack.c.l.b16 %v456
        %v1143 = vunpack.c.h.b16 %v456
        %v1144 = vunpack.c.l.b16 %v457
        %v1145 = vunpack.c.h.b16 %v457
        %v1146 = vunpack.c.l.b16 %v458
        %v1147 = vunpack.c.h.b16 %v458
        %v1148 = vunpack.c.l.b16 %v459
        %v1149 = vunpack.c.h.b16 %v459
        %v1150 = vunpack.c.l.b16 %v460
        %v1151 = vunpack.c.h.b16 %v460
        %v1152 = vunpack.c.l.b16 %v461
        %v1153 = vunpack.c.h.b16 %v461
        %v1154 = vunpack.c.l.b16 %v462
        %v1155 = vunpack.c.h.b16 %v462
        %v1156 = vunpack.c.l.b16 %v463
        %v1157 = vunpack.c.h.b16 %v463
        %v1158 = vunpack.c.l.b16 %v464
        %v1159 = vunpack.c.h.b16 %v464
        %v1160 = vunpack.c.l.b16 %v465
        %v1161 = vunpack.c.h.b16 %v465
        %v1162 = vunpack.c.l.b16 %v466
        %v1163 = vunpack.c.h.b16 %v466
        %v1164 = vunpack.c.l.b16 %v467
        %v1165 = vunpack.c.h.b16 %v467
        %v1166 = vunpack.c.l.b16 %v468
        %v1167 = vunpack.c.h.b16 %v468
        %v1168 = vunpack.c.l.b16 %v469
        %v1169 = vunpack.c.h.b16 %v469
        %v1170 = vunpack.c.l.b16 %v470
        %v1171 = vunpack.c.h.b16 %v470
        %v1172 = vunpack.c.l.b16 %v471
        %v1173 = vunpack.c.h.b16 %v471
        %v1174 = vunpack.c.l.b16 %v472
        %v1175 = vunpack.c.h.b16 %v472
        %v1176 = vunpack.c.l.b16 %v473
        %v1177 = vunpack.c.h.b16 %v473
        %v1178 = vunpack.c.l.b16 %v474
        %v1179 = vunpack.c.h.b16 %v474
        %v1180 = vunpack.c.l.b16 %v475
        %v1181 = vunpack.c.h.b16 %v475
        %v1182 = vunpack.c.l.b16 %v476
        %v1183 = vunpack.c.h.b16 %v476
        %v1184 = vunpack.c.l.b16 %v477
        %v1185 = vunpack.c.h.b16 %v477
        %v1186 = vunpack.c.l.b16 %v478
        %v1187 = vunpack.c.h.b16 %v478
        %v1188 = vunpack.c.l.b16 %v479
        %v1189 = vunpack.c.h.b16 %v479
        %v1190 = vunpack.c.l.b16 %v480
        %v1191 = vunpack.c.h.b16 %v480
        %v1192 = vunpack.c.l.b16 %v481
        %v1193 = vunpack.c.h.b16 %v481
        %v1194 = vunpack.c.l.b16 %v482
        %v1195 = vunpack.c.h.b16 %v482
        %v1196 = vunpack.c.l.b16 %v483
        %v1197 = vunpack.c.h.b16 %v483
        %v1198 = vunpack.c.l.b16 %v484
        %v1199 = vunpack.c.h.b16 %v484
        %v1200 = vunpack.c.l.b16 %v485
        %v1201 = vunpack.c.h.b16 %v485
        %v1202 = vunpack.c.l.b16 %v486
        %v1203 = vunpack.c.h.b16 %v486
        %v1204 = vunpack.c.l.b16 %v487
        %v1205 = vunpack.c.h.b16 %v487
        %v1206 = vunpack.c.l.b16 %v488
        %v1207 = vunpack.c.h.b16 %v488
        %v1208 = vunpack.c.l.b16 %v489
        %v1209 = vunpack.c.h.b16 %v489
        %v1210 = vunpack.c.l.b16 %v490
        %v1211 = vunpack.c.h.b16 %v490
        %v1212 = vunpack.c.l.b16 %v491
        %v1213 = vunpack.c.h.b16 %v491
        %v1214 = vunpack.c.l.b16 %v492
        %v1215 = vunpack.c.h.b16 %v492
        %v1216 = vunpack.c.l.b16 %v493
        %v1217 = vunpack.c.h.b16 %v493
        %v1218 = vunpack.c.l.b16 %v494
        %v1219 = vunpack.c.h.b16 %v494
        %v1220 = vunpack.c.l.b16 %v495
        %v1221 = vunpack.c.h.b16 %v495
        %v1222 = vunpack.c.l.b16 %v496
        %v1223 = vunpack.c.h.b16 %v496
        %v1224 = vunpack.c.l.b16 %v497
        %v1225 = vunpack.c.h.b16 %v497
        %v1226 = vunpack.c.l.b16 %v498
        %v1227 = vunpack.c.h.b16 %v498
        %v1228 = vunpack.c.l.b16 %v499
        %v1229 = vunpack.c.h.b16 %v499
        %v1230 = vunpack.c.l.b16 %v500
        %v1231 = vunpack.c.h.b16 %v500
        %v1232 = vunpack.c.l.b16 %v501
        %v1233 = vunpack.c.h.b16 %v501
        %v1234 = vunpack.c.l.b16 %v502
        %v1235 = vunpack.c.h.b16 %v502
        %v1236 = vunpack.c.l.b16 %v503
        %v1237 = vunpack.c.h.b16 %v503
        %v1238 = vunpack.c.l.b16 %v504
        %v1239 = vunpack.c.h.b16 %v504
        %v1240 = vunpack.c.l.b16 %v505
        %v1241 = vunpack.c.h.b16 %v505
        %v1242 = vunpack.c.l.b16 %v506
        %v1243 = vunpack.c.h.b16 %v506
        %v1244 = vunpack.c.l.b16 %v507
        %v1245 = vunpack.c.h.b16 %v507
        %v1246 = vunpack.c.l.b16 %v508
        %v1247 = vunpack.c.h.b16 %v508
        %v1248 = vunpack.c.l.b16 %v509
        %v1249 = vunpack.c.h.b16 %v509
        %v1250 = vunpack.c.l.b16 %v510
        %v1251 = vunpack.c.h.b16 %v510
        %v1252 = vunpack.c.l.b16 %v511
        %v1253 = vunpack.c.h.b16 %v511
        %v1254 = vunpack.c.l.b16 %v512
        %v1255 = vunpack.c.h.b16 %v512
        %v1256 = vunpack.c.l.b16 %v513
        %v1257 = vunpack.c.h.b16 %v513
        %v1258 = vunpack.c.l.b16 %v514
        %v1259 = vunpack.c.h.b16 %v514
        %v1260 = vunpack.c.l.b16 %v515
        %v1261 = vunpack.c.h.b16 %v515
        %v1262 = vunpack.c.l.b16 %v516
        %v1263 = vunpack.c.h.b16 %v516
        %v1264 = vunpack.c.l.b16 %v517
        %v1265 = vunpack.c.h.b16 %v517
        %v1266 = vunpack.c.l.b16 %v518
        %v1267 = vunpack.c.h.b16 %v518
        %v1268 = vunpack.c.l.b16 %v519
        %v1269 = vunpack.c.h.b16 %v519
        %v1270 = vunpack.c.l.b16 %v520
        %v1271 = vunpack.c.h.b16 %v520
        %v1272 = vunpack.c.l.b16 %v521
        %v1273 = vunpack.c.h.b16 %v521
        %v1274 = vunpack.c.l.b16 %v522
        %v1275 = vunpack.c.h.b16 %v522
        %v1276 = vunpack.c.l.b16 %v523
        %v1277 = vunpack.c.h.b16 %v523
        %v1278 = vunpack.c.l.b16 %v524
        %v1279 = vunpack.c.h.b16 %v524
        %v1280 = vunpack.c.l.b16 %v525
        %v1281 = vunpack.c.h.b16 %v525
        %v1282 = vunpack.c.l.b16 %v526
        %v1283 = vunpack.c.h.b16 %v526
        %v1284 = vunpack.c.l.b16 %v527
        %v1285 = vunpack.c.h.b16 %v527
        %v1286 = vunpack.c.l.b16 %v528
        %v1287 = vunpack.c.h.b16 %v528
        %v1288 = vunpack.c.l.b16 %v529
        %v1289 = vunpack.c.h.b16 %v529
        %v1290 = vunpack.c.l.b16 %v530
        %v1291 = vunpack.c.h.b16 %v530
        %v1292 = vunpack.c.l.b16 %v531
        %v1293 = vunpack.c.h.b16 %v531
        %v1294 = vunpack.c.l.b16 %v532
        %v1295 = vunpack.c.h.b16 %v532
        %v1296 = vunpack.c.l.b16 %v533
        %v1297 = vunpack.c.h.b16 %v533
        %v1298 = vunpack.c.l.b16 %v534
        %v1299 = vunpack.c.h.b16 %v534
        %v1300 = vunpack.c.l.b16 %v535
        %v1301 = vunpack.c.h.b16 %v535
        %v1302 = vunpack.c.l.b16 %v536
        %v1303 = vunpack.c.h.b16 %v536
        %v1304 = vunpack.c.l.b16 %v537
        %v1305 = vunpack.c.h.b16 %v537
        %v1306 = vpack.c.b16 %v826, %v794
        %v1307 = vpack.c.b16 %v827, %v795
        %v1308 = vpack.c.b16 %v828, %v796
        %v1309 = vpack.c.b16 %v829, %v797
        %v1310 = vpack.c.b16 %v830, %v798
        %v1311 = vpack.c.b16 %v831, %v799
        %v1312 = vpack.c.b16 %v832, %v800
        %v1313 = vpack.c.b16 %v833, %v801
        %v1314 = vpack.c.b16 %v834, %v802
        %v1315 = vpack.c.b16 %v835, %v803
        %v1316 = vpack.c.b16 %v836, %v804
        %v1317 = vpack.c.b16 %v837, %v805
        %v1318 = vpack.c.b16 %v838, %v806
        %v1319 = vpack.c.b16 %v839, %v807
        %v1320 = vpack.c.b16 %v840, %v808
        %v1321 = vpack.c.b16 %v841, %v809
        %v1322 = vpack.c.b16 %v842, %v810
        %v1323 = vpack.c.b16 %v843, %v811
        %v1324 = vpack.c.b16 %v844, %v812
        %v1325 = vpack.c.b16 %v845, %v813
        %v1326 = vpack.c.b16 %v846, %v814
        %v1327 = vpack.c.b16 %v847, %v815
        %v1328 = vpack.c.b16 %v848, %v816
        %v1329 = vpack.c.b16 %v849, %v817
        %v1330 = vpack.c.b16 %v850, %v818
        %v1331 = vpack.c.b16 %v851, %v819
        %v1332 = vpack.c.b16 %v852, %v820
        %v1333 = vpack.c.b16 %v853, %v821
        %v1334 = vpack.c.b16 %v854, %v822
        %v1335 = vpack.c.b16 %v855, %v823
        %v1336 = vpack.c.b16 %v856, %v824
        %v1337 = vpack.c.b16 %v857, %v825
        %v1338 = vpack.c.b16 %v890, %v858
        %v1339 = vpack.c.b16 %v891, %v859
        %v1340 = vpack.c.b16 %v892, %v860
        %v1341 = vpack.c.b16 %v893, %v861
        %v1342 = vpack.c.b16 %v894, %v862
        %v1343 = vpack.c.b16 %v895, %v863
        %v1344 = vpack.c.b16 %v896, %v864
        %v1345 = vpack.c.b16 %v897, %v865
        %v1346 = vpack.c.b16 %v898, %v866
        %v1347 = vpack.c.b16 %v899, %v867
        %v1348 = vpack.c.b16 %v900, %v868
        %v1349 = vpack.c.b16 %v901, %v869
        %v1350 = vpack.c.b16 %v902, %v870
        %v1351 = vpack.c.b16 %v903, %v871
        %v1352 = vpack.c.b16 %v904, %v872
        %v1353 = vpack.c.b16 %v905, %v873
        %v1354 = vpack.c.b16 %v906, %v874
        %v1355 = vpack.c.b16 %v907, %v875
        %v1356 = vpack.c.b16 %v908, %v876
        %v1357 = vpack.c.b16 %v909, %v877
        %v1358 = vpack.c.b16 %v910, %v878
        %v1359 = vpack.c.b16 %v911, %v879
        %v1360 = vpack.c.b16 %v912, %v880
        %v1361 = vpack.c.b16 %v913, %v881
        %v1362 = vpack.c.b16 %v914, %v882
        %v1363 = vpack.c.b16 %v915, %v883
        %v1364 = vpack.c.b16 %v916, %v884
        %v1365 = vpack.c.b16 %v917, %v885
        %v1366 = vpack.c.b16 %v918, %v886
        %v1367 = vpack.c.b16 %v919, %v887
        %v1368 = vpack.c.b16 %v920, %v888
        %v1369 = vpack.c.b16 %v921, %v889
        %v1370 = vpack.c.b16 %v954, %v922
        %v1371 = vpack.c.b16 %v955, %v923
        %v1372 = vpack.c.b16 %v956, %v924
        %v1373 = vpack.c.b16 %v957, %v925
        %v1374 = vpack.c.b16 %v958, %v926
        %v1375 = vpack.c.b16 %v959, %v927
        %v1376 = vpack.c.b16 %v960, %v928
        %v1377 = vpack.c.b16 %v961, %v929
        %v1378 = vpack.c.b16 %v962, %v930
        %v1379 = vpack.c.b16 %v963, %v931
        %v1380 = vpack.c.b16 %v964, %v932
        %v1381 = vpack.c.b16 %v965, %v933
        %v1382 = vpack.c.b16 %v966, %v934
        %v1383 = vpack.c.b16 %v967, %v935
        %v1384 = vpack.c.b16 %v968, %v936
        %v1385 = vpack.c.b16 %v969, %v937
        %v1386 = vpack.c.b16 %v970, %v938
        %v1387 = vpack.c.b16 %v971, %v939
        %v1388 = vpack.c.b16 %v972, %v940
        %v1389 = vpack.c.b16 %v973, %v941
        %v1390 = vpack.c.b16 %v974, %v942
        %v1391 = vpack.c.b16 %v975, %v943
        %v1392 = vpack.c.b16 %v976, %v944
        %v1393 = vpack.c.b16 %v977, %v945
        %v1394 = vpack.c.b16 %v978, %v946
        %v1395 = vpack.c.b16 %v979, %v947
        %v1396 = vpack.c.b16 %v980, %v948
        %v1397 = vpack.c.b16 %v981, %v949
        %v1398 = vpack.c.b16 %v982, %v950
        %v1399 = vpack.c.b16 %v983, %v951
        %v1400 = vpack.c.b16 %v984, %v952
        %v1401 = vpack.c.b16 %v985, %v953
        %v1402 = vpack.c.b16 %v1018, %v986
        %v1403 = vpack.c.b16 %v1019, %v987
        %v1404 = vpack.c.b16 %v1020, %v988
        %v1405 = vpack.c.b16 %v1021, %v989
        %v1406 = vpack.c.b16 %v1022, %v990
        %v1407 = vpack.c.b16 %v1023, %v991
        %v1408 = vpack.c.b16 %v1024, %v992
        %v1409 = vpack.c.b16 %v1025, %v993
        %v1410 = vpack.c.b16 %v1026, %v994
        %v1411 = vpack.c.b16 %v1027, %v995
        %v1412 = vpack.c.b16 %v1028, %v996
        %v1413 = vpack.c.b16 %v1029, %v997
        %v1414 = vpack.c.b16 %v1030, %v998
        %v1415 = vpack.c.b16 %v1031, %v999
        %v1416 = vpack.c.b16 %v1032, %v1000
        %v1417 = vpack.c.b16 %v1033, %v1001
        %v1418 = vpack.c.b16 %v1034, %v1002
        %v1419 = vpack.c.b16 %v1035, %v1003
        %v1420 = vpack.c.b16 %v1036, %v1004
        %v1421 = vpack.c.b16 %v1037, %v1005
        %v1422 = vpack.c.b16 %v1038, %v1006
        %v1423 = vpack.c.b16 %v1039, %v1007
        %v1424 = vpack.c.b16 %v1040, %v1008
        %v1425 = vpack.c.b16 %v1041, %v1009
        %v1426 = vpack.c.b16 %v1042, %v1010
        %v1427 = vpack.c.b16 %v1043, %v1011
        %v1428 = vpack.c.b16 %v1044, %v1012
        %v1429 = vpack.c.b16 %v1045, %v1013
        %v1430 = vpack.c.b16 %v1046, %v1014
        %v1431 = vpack.c.b16 %v1047, %v1015
        %v1432 = vpack.c.b16 %v1048, %v1016
        %v1433 = vpack.c.b16 %v1049, %v1017
        %v1434 = vpack.c.b16 %v1082, %v1050
        %v1435 = vpack.c.b16 %v1083, %v1051
        %v1436 = vpack.c.b16 %v1084, %v1052
        %v1437 = vpack.c.b16 %v1085, %v1053
        %v1438 = vpack.c.b16 %v1086, %v1054
        %v1439 = vpack.c.b16 %v1087, %v1055
        %v1440 = vpack.c.b16 %v1088, %v1056
        %v1441 = vpack.c.b16 %v1089, %v1057
        %v1442 = vpack.c.b16 %v1090, %v1058
        %v1443 = vpack.c.b16 %v1091, %v1059
        %v1444 = vpack.c.b16 %v1092, %v1060
        %v1445 = vpack.c.b16 %v1093, %v1061
        %v1446 = vpack.c.b16 %v1094, %v1062
        %v1447 = vpack.c.b16 %v1095, %v1063
        %v1448 = vpack.c.b16 %v1096, %v1064
        %v1449 = vpack.c.b16 %v1097, %v1065
        %v1450 = vpack.c.b16 %v1098, %v1066
        %v1451 = vpack.c.b16 %v1099, %v1067
        %v1452 = vpack.c.b16 %v1100, %v1068
        %v1453 = vpack.c.b16 %v1101, %v1069
        %v1454 = vpack.c.b16 %v1102, %v1070
        %v1455 = vpack.c.b16 %v1103, %v1071
        %v1456 = vpack.c.b16 %v1104, %v1072
        %v1457 = vpack.c.b16 %v1105, %v1073
        %v1458 = vpack.c.b16 %v1106, %v1074
        %v1459 = vpack.c.b16 %v1107, %v1075
        %v1460 = vpack.c.b16 %v1108, %v1076
        %v1461 = vpack.c.b16 %v1109, %v1077
        %v1462 = vpack.c.b16 %v1110, %v1078
        %v1463 = vpack.c.b16 %v1111, %v1079
        %v1464 = vpack.c.b16 %v1112, %v1080
        %v1465 = vpack.c.b16 %v1113, %v1081
        %v1466 = vpack.c.b16 %v1146, %v1114
        %v1467 = vpack.c.b16 %v1147, %v1115
        %v1468 = vpack.c.b16 %v1148, %v1116
        %v1469 = vpack.c.b16 %v1149, %v1117
        %v1470 = vpack.c.b16 %v1150, %v1118
        %v1471 = vpack.c.b16 %v1151, %v1119
        %v1472 = vpack.c.b16 %v1152, %v1120
        %v1473 = vpack.c.b16 %v1153, %v1121
        %v1474 = vpack.c.b16 %v1154, %v1122
        %v1475 = vpack.c.b16 %v1155, %v1123
        %v1476 = vpack.c.b16 %v1156, %v1124
        %v1477 = vpack.c.b16 %v1157, %v1125
        %v1478 = vpack.c.b16 %v1158, %v1126
        %v1479 = vpack.c.b16 %v1159, %v1127
        %v1480 = vpack.c.b16 %v1160, %v1128
        %v1481 = vpack.c.b16 %v1161, %v1129
        %v1482 = vpack.c.b16 %v1162, %v1130
        %v1483 = vpack.c.b16 %v1163, %v1131
        %v1484 = vpack.c.b16 %v1164, %v1132
        %v1485 = vpack.c.b16 %v1165, %v1133
        %v1486 = vpack.c.b16 %v1166, %v1134
        %v1487 = vpack.c.b16 %v1167, %v1135
        %v1488 = vpack.c.b16 %v1168, %v1136
        %v1489 = vpack.c.b16 %v1169, %v1137
        %v1490 = vpack.c.b16 %v1170, %v1138
        %v1491 = vpack.c.b16 %v1171, %v1139
        %v1492 = vpack.c.b16 %v1172, %v1140
        %v1493 = vpack.c.b16 %v1173, %v1141
        %v1494 = vpack.c.b16 %v1174, %v1142
        %v1495 = vpack.c.b16 %v1175, %v1143
        %v1496 = vpack.c.b16 %v1176, %v1144
        %v1497 = vpack.c.b16 %v1177, %v1145
        %v1498 = vpack.c.b16 %v1210, %v1178
        %v1499 = vpack.c.b16 %v1211, %v1179
        %v1500 = vpack.c.b16 %v1212, %v1180
        %v1501 = vpack.c.b16 %v1213, %v1181
        %v1502 = vpack.c.b16 %v1214, %v1182
        %v1503 = vpack.c.b16 %v1215, %v1183
        %v1504 = vpack.c.b16 %v1216, %v1184
        %v1505 = vpack.c.b16 %v1217, %v1185
        %v1506 = vpack.c.b16 %v1218, %v1186
        %v1507 = vpack.c.b16 %v1219, %v1187
        %v1508 = vpack.c.b16 %v1220, %v1188
        %v1509 = vpack.c.b16 %v1221, %v1189
        %v1510 = vpack.c.b16 %v1222, %v1190
        %v1511 = vpack.c.b16 %v1223, %v1191
        %v1512 = vpack.c.b16 %v1224, %v1192
        %v1513 = vpack.c.b16 %v1225, %v1193
        %v1514 = vpack.c.b16 %v1226, %v1194
        %v1515 = vpack.c.b16 %v1227, %v1195
        %v1516 = vpack.c.b16 %v1228, %v1196
        %v1517 = vpack.c.b16 %v1229, %v1197
        %v1518 = vpack.c.b16 %v1230, %v1198
        %v1519 = vpack.c.b16 %v1231, %v1199
        %v1520 = vpack.c.b16 %v1232, %v1200
        %v1521 = vpack.c.b16 %v1233, %v1201
        %v1522 = vpack.c.b16 %v1234, %v1202
        %v1523 = vpack.c.b16 %v1235, %v1203
        %v1524 = vpack.c.b16 %v1236, %v1204
        %v1525 = vpack.c.b16 %v1237, %v1205
        %v1526 = vpack.c.b16 %v1238, %v1206
        %v1527 = vpack.c.b16 %v1239, %v1207
        %v1528 = vpack.c.b16 %v1240, %v1208
        %v1529 = vpack.c.b16 %v1241, %v1209
        %v1530 = vpack.c.b16 %v1274, %v1242
        %v1531 = vpack.c.b16 %v1275, %v1243
        %v1532 = vpack.c.b16 %v1276, %v1244
        %v1533 = vpack.c.b16 %v1277, %v1245
        %v1534 = vpack.c.b16 %v1278, %v1246
        %v1535 = vpack.c.b16 %v1279, %v1247
        %v1536 = vpack.c.b16 %v1280, %v1248
        %v1537 = vpack.c.b16 %v1281, %v1249
        %v1538 = vpack.c.b16 %v1282, %v1250
        %v1539 = vpack.c.b16 %v1283, %v1251
        %v1540 = vpack.c.b16 %v1284, %v1252
        %v1541 = vpack.c.b16 %v1285, %v1253
        %v1542 = vpack.c.b16 %v1286, %v1254
        %v1543 = vpack.c.b16 %v1287, %v1255
        %v1544 = vpack.c.b16 %v1288, %v1256
        %v1545 = vpack.c.b16 %v1289, %v1257
        %v1546 = vpack.c.b16 %v1290, %v1258
        %v1547 = vpack.c.b16 %v1291, %v1259
        %v1548 = vpack.c.b16 %v1292, %v1260
        %v1549 = vpack.c.b16 %v1293, %v1261
        %v1550 = vpack.c.b16 %v1294, %v1262
        %v1551 = vpack.c.b16 %v1295, %v1263
        %v1552 = vpack.c.b16 %v1296, %v1264
        %v1553 = vpack.c.b16 %v1297, %v1265
        %v1554 = vpack.c.b16 %v1298, %v1266
        %v1555 = vpack.c.b16 %v1299, %v1267
        %v1556 = vpack.c.b16 %v1300, %v1268
        %v1557 = vpack.c.b16 %v1301, %v1269
        %v1558 = vpack.c.b16 %v1302, %v1270
        %v1559 = vpack.c.b16 %v1303, %v1271
        %v1560 = vpack.c.b16 %v1304, %v1272
        %v1561 = vpack.c.b16 %v1305, %v1273
        %1818 = vmatprep.subr.bf16.mxu0 %v1307
        %1819 = vmatpush1.bf16.msra.mxu0 %v1306
        %1820 = vmatprep.subr.bf16.mxu0 %v1339
        %1821 = vmatpush1.bf16.msra.mxu0 %v1338
        %1822 = vmatprep.subr.bf16.mxu0 %v1371
        %1823 = vmatpush1.bf16.msra.mxu0 %v1370
        %1824 = vmatprep.subr.bf16.mxu0 %v1403
        %1825 = vmatpush1.bf16.msra.mxu0 %v1402
        %1826 = vmatprep.subr.bf16.mxu0 %v1435
        %1827 = vmatpush1.bf16.msra.mxu0 %v1434
        %1828 = vmatprep.subr.bf16.mxu0 %v1467
        %1829 = vmatpush1.bf16.msra.mxu0 %v1466
        %1830 = vmatprep.subr.bf16.mxu0 %v1499
        %1831 = vmatpush1.bf16.msra.mxu0 %v1498
        %1832 = vmatprep.subr.bf16.mxu0 %v1531
        %1833 = vmatpush1.bf16.msra.mxu0 %v1530
        %1834 = vmatprep.subr.bf16.mxu0 0
        %1835 = vmatpush1.bf16.msra.mxu0 0
        %1836 = vmatprep.subr.bf16.mxu0 0
        %1837 = vmatpush1.bf16.msra.mxu0 0
        %1838 = vmatprep.subr.bf16.mxu0 0
        %1839 = vmatpush1.bf16.msra.mxu0 0
        %1840 = vmatprep.subr.bf16.mxu0 0
        %1841 = vmatpush1.bf16.msra.mxu0 0
        %1842 = vmatprep.subr.bf16.mxu0 0
        %1843 = vmatpush1.bf16.msra.mxu0 0
        %1844 = vmatprep.subr.bf16.mxu0 0
        %1845 = vmatpush1.bf16.msra.mxu0 0
        %1846 = vmatprep.subr.bf16.mxu0 0
        %1847 = vmatpush1.bf16.msra.mxu0 0
        %1848 = vmatprep.subr.bf16.mxu0 0
        %1849 = vmatpush1.bf16.msra.mxu0 0
        %1850 = vmatprep.mubr.bf16.mxu0 0
        %1851 = vmatmul.mubr.bf16.gmra.mrb[0].mxu0 %v281
        %v1852 = vpop.f32.mrb[0].mxu0
        %v1853 = vadd.f32 0.0, %v1852
        %v1854 = vpop.f32.mrb[0].mxu0
        %v1855 = vadd.f32 0.0, %v1854
        %v1856 = vpop.f32.mrb[0].mxu0
        %v1857 = vpop.f32.mrb[0].mxu0
        %1858 = vdwg.mxu0
        %1859 = vmatprep.subr.bf16.mxu0 %v1309
        %1860 = vmatpush1.bf16.msra.mxu0 %v1308
        %1861 = vmatprep.subr.bf16.mxu0 %v1341
        %1862 = vmatpush1.bf16.msra.mxu0 %v1340
        %1863 = vmatprep.subr.bf16.mxu0 %v1373
        %1864 = vmatpush1.bf16.msra.mxu0 %v1372
        %1865 = vmatprep.subr.bf16.mxu0 %v1405
        %1866 = vmatpush1.bf16.msra.mxu0 %v1404
        %1867 = vmatprep.subr.bf16.mxu0 %v1437
        %1868 = vmatpush1.bf16.msra.mxu0 %v1436
        %1869 = vmatprep.subr.bf16.mxu0 %v1469
        %1870 = vmatpush1.bf16.msra.mxu0 %v1468
        %1871 = vmatprep.subr.bf16.mxu0 %v1501
        %1872 = vmatpush1.bf16.msra.mxu0 %v1500
        %1873 = vmatprep.subr.bf16.mxu0 %v1533
        %1874 = vmatpush1.bf16.msra.mxu0 %v1532
        %1875 = vmatprep.subr.bf16.mxu0 0
        %1876 = vmatpush1.bf16.msra.mxu0 0
        %1877 = vmatprep.subr.bf16.mxu0 0
        %1878 = vmatpush1.bf16.msra.mxu0 0
        %1879 = vmatprep.subr.bf16.mxu0 0
        %1880 = vmatpush1.bf16.msra.mxu0 0
        %1881 = vmatprep.subr.bf16.mxu0 0
        %1882 = vmatpush1.bf16.msra.mxu0 0
        %1883 = vmatprep.subr.bf16.mxu0 0
        %1884 = vmatpush1.bf16.msra.mxu0 0
        %1885 = vmatprep.subr.bf16.mxu0 0
        %1886 = vmatpush1.bf16.msra.mxu0 0
        %1887 = vmatprep.subr.bf16.mxu0 0
        %1888 = vmatpush1.bf16.msra.mxu0 0
        %1889 = vmatprep.subr.bf16.mxu0 0
        %1890 = vmatpush1.bf16.msra.mxu0 0
        %1891 = vmatprep.mubr.bf16.mxu0 0
        %1892 = vmatmul.mubr.bf16.gmra.mrb[0].mxu0 %v281
        %v1893 = vpop.f32.mrb[0].mxu0
        %v1894 = vadd.f32 0.0, %v1893
        %v1895 = vpop.f32.mrb[0].mxu0
        %v1896 = vadd.f32 0.0, %v1895
        %v1897 = vpop.f32.mrb[0].mxu0
        %v1898 = vpop.f32.mrb[0].mxu0
        %1899 = vdwg.mxu0
        %1900 = vmatprep.subr.bf16.mxu0 %v1311
        %1901 = vmatpush1.bf16.msra.mxu0 %v1310
        %1902 = vmatprep.subr.bf16.mxu0 %v1343
        %1903 = vmatpush1.bf16.msra.mxu0 %v1342
        %1904 = vmatprep.subr.bf16.mxu0 %v1375
        %1905 = vmatpush1.bf16.msra.mxu0 %v1374
        %1906 = vmatprep.subr.bf16.mxu0 %v1407
        %1907 = vmatpush1.bf16.msra.mxu0 %v1406
        %1908 = vmatprep.subr.bf16.mxu0 %v1439
        %1909 = vmatpush1.bf16.msra.mxu0 %v1438
        %1910 = vmatprep.subr.bf16.mxu0 %v1471
        %1911 = vmatpush1.bf16.msra.mxu0 %v1470
        %1912 = vmatprep.subr.bf16.mxu0 %v1503
        %1913 = vmatpush1.bf16.msra.mxu0 %v1502
        %1914 = vmatprep.subr.bf16.mxu0 %v1535
        %1915 = vmatpush1.bf16.msra.mxu0 %v1534
        %1916 = vmatprep.subr.bf16.mxu0 0
        %1917 = vmatpush1.bf16.msra.mxu0 0
        %1918 = vmatprep.subr.bf16.mxu0 0
        %1919 = vmatpush1.bf16.msra.mxu0 0
        %1920 = vmatprep.subr.bf16.mxu0 0
        %1921 = vmatpush1.bf16.msra.mxu0 0
        %1922 = vmatprep.subr.bf16.mxu0 0
        %1923 = vmatpush1.bf16.msra.mxu0 0
        %1924 = vmatprep.subr.bf16.mxu0 0
        %1925 = vmatpush1.bf16.msra.mxu0 0
        %1926 = vmatprep.subr.bf16.mxu0 0
        %1927 = vmatpush1.bf16.msra.mxu0 0
        %1928 = vmatprep.subr.bf16.mxu0 0
        %1929 = vmatpush1.bf16.msra.mxu0 0
        %1930 = vmatprep.subr.bf16.mxu0 0
        %1931 = vmatpush1.bf16.msra.mxu0 0
        %1932 = vmatprep.mubr.bf16.mxu0 0
        %1933 = vmatmul.mubr.bf16.gmra.mrb[0].mxu0 %v281
        %v1934 = vpop.f32.mrb[0].mxu0
        %v1935 = vadd.f32 0.0, %v1934
        %v1936 = vpop.f32.mrb[0].mxu0
        %v1937 = vadd.f32 0.0, %v1936
        %v1938 = vpop.f32.mrb[0].mxu0
        %v1939 = vpop.f32.mrb[0].mxu0
        %1940 = vdwg.mxu0
        %1941 = vmatprep.subr.bf16.mxu0 %v1313
        %1942 = vmatpush1.bf16.msra.mxu0 %v1312
        %1943 = vmatprep.subr.bf16.mxu0 %v1345
        %1944 = vmatpush1.bf16.msra.mxu0 %v1344
        %1945 = vmatprep.subr.bf16.mxu0 %v1377
        %1946 = vmatpush1.bf16.msra.mxu0 %v1376
        %1947 = vmatprep.subr.bf16.mxu0 %v1409
        %1948 = vmatpush1.bf16.msra.mxu0 %v1408
        %1949 = vmatprep.subr.bf16.mxu0 %v1441
        %1950 = vmatpush1.bf16.msra.mxu0 %v1440
        %1951 = vmatprep.subr.bf16.mxu0 %v1473
        %1952 = vmatpush1.bf16.msra.mxu0 %v1472
        %1953 = vmatprep.subr.bf16.mxu0 %v1505
        %1954 = vmatpush1.bf16.msra.mxu0 %v1504
        %1955 = vmatprep.subr.bf16.mxu0 %v1537
        %1956 = vmatpush1.bf16.msra.mxu0 %v1536
        %1957 = vmatprep.subr.bf16.mxu0 0
        %1958 = vmatpush1.bf16.msra.mxu0 0
        %1959 = vmatprep.subr.bf16.mxu0 0
        %1960 = vmatpush1.bf16.msra.mxu0 0
        %1961 = vmatprep.subr.bf16.mxu0 0
        %1962 = vmatpush1.bf16.msra.mxu0 0
        %1963 = vmatprep.subr.bf16.mxu0 0
        %1964 = vmatpush1.bf16.msra.mxu0 0
        %1965 = vmatprep.subr.bf16.mxu0 0
        %1966 = vmatpush1.bf16.msra.mxu0 0
        %1967 = vmatprep.subr.bf16.mxu0 0
        %1968 = vmatpush1.bf16.msra.mxu0 0
        %1969 = vmatprep.subr.bf16.mxu0 0
        %1970 = vmatpush1.bf16.msra.mxu0 0
        %1971 = vmatprep.subr.bf16.mxu0 0
        %1972 = vmatpush1.bf16.msra.mxu0 0
        %1973 = vmatprep.mubr.bf16.mxu0 0
        %1974 = vmatmul.mubr.bf16.gmra.mrb[0].mxu0 %v281
        %v1975 = vpop.f32.mrb[0].mxu0
        %v1976 = vadd.f32 0.0, %v1975
        %v1977 = vpop.f32.mrb[0].mxu0
        %v1978 = vadd.f32 0.0, %v1977
        %v1979 = vpop.f32.mrb[0].mxu0
        %v1980 = vpop.f32.mrb[0].mxu0
        %1981 = vdwg.mxu0
        %1982 = vmatprep.subr.bf16.mxu0 %v1315
        %1983 = vmatpush1.bf16.msra.mxu0 %v1314
        %1984 = vmatprep.subr.bf16.mxu0 %v1347
        %1985 = vmatpush1.bf16.msra.mxu0 %v1346
        %1986 = vmatprep.subr.bf16.mxu0 %v1379
        %1987 = vmatpush1.bf16.msra.mxu0 %v1378
        %1988 = vmatprep.subr.bf16.mxu0 %v1411
        %1989 = vmatpush1.bf16.msra.mxu0 %v1410
        %1990 = vmatprep.subr.bf16.mxu0 %v1443
        %1991 = vmatpush1.bf16.msra.mxu0 %v1442
        %1992 = vmatprep.subr.bf16.mxu0 %v1475
        %1993 = vmatpush1.bf16.msra.mxu0 %v1474
        %1994 = vmatprep.subr.bf16.mxu0 %v1507
        %1995 = vmatpush1.bf16.msra.mxu0 %v1506
        %1996 = vmatprep.subr.bf16.mxu0 %v1539
        %1997 = vmatpush1.bf16.msra.mxu0 %v1538
        %1998 = vmatprep.subr.bf16.mxu0 0
        %1999 = vmatpush1.bf16.msra.mxu0 0
        %2000 = vmatprep.subr.bf16.mxu0 0
        %2001 = vmatpush1.bf16.msra.mxu0 0
        %2002 = vmatprep.subr.bf16.mxu0 0
        %2003 = vmatpush1.bf16.msra.mxu0 0
        %2004 = vmatprep.subr.bf16.mxu0 0
        %2005 = vmatpush1.bf16.msra.mxu0 0
        %2006 = vmatprep.subr.bf16.mxu0 0
        %2007 = vmatpush1.bf16.msra.mxu0 0
        %2008 = vmatprep.subr.bf16.mxu0 0
        %2009 = vmatpush1.bf16.msra.mxu0 0
        %2010 = vmatprep.subr.bf16.mxu0 0
        %2011 = vmatpush1.bf16.msra.mxu0 0
        %2012 = vmatprep.subr.bf16.mxu0 0
        %2013 = vmatpush1.bf16.msra.mxu0 0
        %2014 = vmatprep.mubr.bf16.mxu0 0
        %2015 = vmatmul.mubr.bf16.gmra.mrb[0].mxu0 %v281
        %v2016 = vpop.f32.mrb[0].mxu0
        %v2017 = vadd.f32 0.0, %v2016
        %v2018 = vpop.f32.mrb[0].mxu0
        %v2019 = vadd.f32 0.0, %v2018
        %v2020 = vpop.f32.mrb[0].mxu0
        %v2021 = vpop.f32.mrb[0].mxu0
        %2022 = vdwg.mxu0
        %2023 = vmatprep.subr.bf16.mxu0 %v1317
        %2024 = vmatpush1.bf16.msra.mxu0 %v1316
        %2025 = vmatprep.subr.bf16.mxu0 %v1349
        %2026 = vmatpush1.bf16.msra.mxu0 %v1348
        %2027 = vmatprep.subr.bf16.mxu0 %v1381
        %2028 = vmatpush1.bf16.msra.mxu0 %v1380
        %2029 = vmatprep.subr.bf16.mxu0 %v1413
        %2030 = vmatpush1.bf16.msra.mxu0 %v1412
        %2031 = vmatprep.subr.bf16.mxu0 %v1445
        %2032 = vmatpush1.bf16.msra.mxu0 %v1444
        %2033 = vmatprep.subr.bf16.mxu0 %v1477
        %2034 = vmatpush1.bf16.msra.mxu0 %v1476
        %2035 = vmatprep.subr.bf16.mxu0 %v1509
        %2036 = vmatpush1.bf16.msra.mxu0 %v1508
        %2037 = vmatprep.subr.bf16.mxu0 %v1541
        %2038 = vmatpush1.bf16.msra.mxu0 %v1540
        %2039 = vmatprep.subr.bf16.mxu0 0
        %2040 = vmatpush1.bf16.msra.mxu0 0
        %2041 = vmatprep.subr.bf16.mxu0 0
        %2042 = vmatpush1.bf16.msra.mxu0 0
        %2043 = vmatprep.subr.bf16.mxu0 0
        %2044 = vmatpush1.bf16.msra.mxu0 0
        %2045 = vmatprep.subr.bf16.mxu0 0
        %2046 = vmatpush1.bf16.msra.mxu0 0
        %2047 = vmatprep.subr.bf16.mxu0 0
        %2048 = vmatpush1.bf16.msra.mxu0 0
        %2049 = vmatprep.subr.bf16.mxu0 0
        %2050 = vmatpush1.bf16.msra.mxu0 0
        %2051 = vmatprep.subr.bf16.mxu0 0
        %2052 = vmatpush1.bf16.msra.mxu0 0
        %2053 = vmatprep.subr.bf16.mxu0 0
        %2054 = vmatpush1.bf16.msra.mxu0 0
        %2055 = vmatprep.mubr.bf16.mxu0 0
        %2056 = vmatmul.mubr.bf16.gmra.mrb[0].mxu0 %v281
        %v2057 = vpop.f32.mrb[0].mxu0
        %v2058 = vadd.f32 0.0, %v2057
        %v2059 = vpop.f32.mrb[0].mxu0
        %v2060 = vadd.f32 0.0, %v2059
        %v2061 = vpop.f32.mrb[0].mxu0
        %v2062 = vpop.f32.mrb[0].mxu0
        %2063 = vdwg.mxu0
        %2064 = vmatprep.subr.bf16.mxu0 %v1319
        %2065 = vmatpush1.bf16.msra.mxu0 %v1318
        %2066 = vmatprep.subr.bf16.mxu0 %v1351
        %2067 = vmatpush1.bf16.msra.mxu0 %v1350
        %2068 = vmatprep.subr.bf16.mxu0 %v1383
        %2069 = vmatpush1.bf16.msra.mxu0 %v1382
        %2070 = vmatprep.subr.bf16.mxu0 %v1415
        %2071 = vmatpush1.bf16.msra.mxu0 %v1414
        %2072 = vmatprep.subr.bf16.mxu0 %v1447
        %2073 = vmatpush1.bf16.msra.mxu0 %v1446
        %2074 = vmatprep.subr.bf16.mxu0 %v1479
        %2075 = vmatpush1.bf16.msra.mxu0 %v1478
        %2076 = vmatprep.subr.bf16.mxu0 %v1511
        %2077 = vmatpush1.bf16.msra.mxu0 %v1510
        %2078 = vmatprep.subr.bf16.mxu0 %v1543
        %2079 = vmatpush1.bf16.msra.mxu0 %v1542
        %2080 = vmatprep.subr.bf16.mxu0 0
        %2081 = vmatpush1.bf16.msra.mxu0 0
        %2082 = vmatprep.subr.bf16.mxu0 0
        %2083 = vmatpush1.bf16.msra.mxu0 0
        %2084 = vmatprep.subr.bf16.mxu0 0
        %2085 = vmatpush1.bf16.msra.mxu0 0
        %2086 = vmatprep.subr.bf16.mxu0 0
        %2087 = vmatpush1.bf16.msra.mxu0 0
        %2088 = vmatprep.subr.bf16.mxu0 0
        %2089 = vmatpush1.bf16.msra.mxu0 0
        %2090 = vmatprep.subr.bf16.mxu0 0
        %2091 = vmatpush1.bf16.msra.mxu0 0
        %2092 = vmatprep.subr.bf16.mxu0 0
        %2093 = vmatpush1.bf16.msra.mxu0 0
        %2094 = vmatprep.subr.bf16.mxu0 0
        %2095 = vmatpush1.bf16.msra.mxu0 0
        %2096 = vmatprep.mubr.bf16.mxu0 0
        %2097 = vmatmul.mubr.bf16.gmra.mrb[0].mxu0 %v281
        %v2098 = vpop.f32.mrb[0].mxu0
        %v2099 = vadd.f32 0.0, %v2098
        %v2100 = vpop.f32.mrb[0].mxu0
        %v2101 = vadd.f32 0.0, %v2100
        %v2102 = vpop.f32.mrb[0].mxu0
        %v2103 = vpop.f32.mrb[0].mxu0
        %2104 = vdwg.mxu0
        %2105 = vmatprep.subr.bf16.mxu0 %v1321
        %2106 = vmatpush1.bf16.msra.mxu0 %v1320
        %2107 = vmatprep.subr.bf16.mxu0 %v1353
        %2108 = vmatpush1.bf16.msra.mxu0 %v1352
        %2109 = vmatprep.subr.bf16.mxu0 %v1385
        %2110 = vmatpush1.bf16.msra.mxu0 %v1384
        %2111 = vmatprep.subr.bf16.mxu0 %v1417
        %2112 = vmatpush1.bf16.msra.mxu0 %v1416
        %2113 = vmatprep.subr.bf16.mxu0 %v1449
        %2114 = vmatpush1.bf16.msra.mxu0 %v1448
        %2115 = vmatprep.subr.bf16.mxu0 %v1481
        %2116 = vmatpush1.bf16.msra.mxu0 %v1480
        %2117 = vmatprep.subr.bf16.mxu0 %v1513
        %2118 = vmatpush1.bf16.msra.mxu0 %v1512
        %2119 = vmatprep.subr.bf16.mxu0 %v1545
        %2120 = vmatpush1.bf16.msra.mxu0 %v1544
        %2121 = vmatprep.subr.bf16.mxu0 0
        %2122 = vmatpush1.bf16.msra.mxu0 0
        %2123 = vmatprep.subr.bf16.mxu0 0
        %2124 = vmatpush1.bf16.msra.mxu0 0
        %2125 = vmatprep.subr.bf16.mxu0 0
        %2126 = vmatpush1.bf16.msra.mxu0 0
        %2127 = vmatprep.subr.bf16.mxu0 0
        %2128 = vmatpush1.bf16.msra.mxu0 0
        %2129 = vmatprep.subr.bf16.mxu0 0
        %2130 = vmatpush1.bf16.msra.mxu0 0
        %2131 = vmatprep.subr.bf16.mxu0 0
        %2132 = vmatpush1.bf16.msra.mxu0 0
        %2133 = vmatprep.subr.bf16.mxu0 0
        %2134 = vmatpush1.bf16.msra.mxu0 0
        %2135 = vmatprep.subr.bf16.mxu0 0
        %2136 = vmatpush1.bf16.msra.mxu0 0
        %2137 = vmatprep.mubr.bf16.mxu0 0
        %2138 = vmatmul.mubr.bf16.gmra.mrb[0].mxu0 %v281
        %v2139 = vpop.f32.mrb[0].mxu0
        %v2140 = vadd.f32 0.0, %v2139
        %v2141 = vpop.f32.mrb[0].mxu0
        %v2142 = vadd.f32 0.0, %v2141
        %v2143 = vpop.f32.mrb[0].mxu0
        %v2144 = vpop.f32.mrb[0].mxu0
        %2145 = vdwg.mxu0
        %2146 = vmatprep.subr.bf16.mxu0 %v1323
        %2147 = vmatpush1.bf16.msra.mxu0 %v1322
        %2148 = vmatprep.subr.bf16.mxu0 %v1355
        %2149 = vmatpush1.bf16.msra.mxu0 %v1354
        %2150 = vmatprep.subr.bf16.mxu0 %v1387
        %2151 = vmatpush1.bf16.msra.mxu0 %v1386
        %2152 = vmatprep.subr.bf16.mxu0 %v1419
        %2153 = vmatpush1.bf16.msra.mxu0 %v1418
        %2154 = vmatprep.subr.bf16.mxu0 %v1451
        %2155 = vmatpush1.bf16.msra.mxu0 %v1450
        %2156 = vmatprep.subr.bf16.mxu0 %v1483
        %2157 = vmatpush1.bf16.msra.mxu0 %v1482
        %2158 = vmatprep.subr.bf16.mxu0 %v1515
        %2159 = vmatpush1.bf16.msra.mxu0 %v1514
        %2160 = vmatprep.subr.bf16.mxu0 %v1547
        %2161 = vmatpush1.bf16.msra.mxu0 %v1546
        %2162 = vmatprep.subr.bf16.mxu0 0
        %2163 = vmatpush1.bf16.msra.mxu0 0
        %2164 = vmatprep.subr.bf16.mxu0 0
        %2165 = vmatpush1.bf16.msra.mxu0 0
        %2166 = vmatprep.subr.bf16.mxu0 0
        %2167 = vmatpush1.bf16.msra.mxu0 0
        %2168 = vmatprep.subr.bf16.mxu0 0
        %2169 = vmatpush1.bf16.msra.mxu0 0
        %2170 = vmatprep.subr.bf16.mxu0 0
        %2171 = vmatpush1.bf16.msra.mxu0 0
        %2172 = vmatprep.subr.bf16.mxu0 0
        %2173 = vmatpush1.bf16.msra.mxu0 0
        %2174 = vmatprep.subr.bf16.mxu0 0
        %2175 = vmatpush1.bf16.msra.mxu0 0
        %2176 = vmatprep.subr.bf16.mxu0 0
        %2177 = vmatpush1.bf16.msra.mxu0 0
        %2178 = vmatprep.mubr.bf16.mxu0 0
        %2179 = vmatmul.mubr.bf16.gmra.mrb[0].mxu0 %v281
        %v2180 = vpop.f32.mrb[0].mxu0
        %v2181 = vadd.f32 0.0, %v2180
        %v2182 = vpop.f32.mrb[0].mxu0
        %v2183 = vadd.f32 0.0, %v2182
        %v2184 = vpop.f32.mrb[0].mxu0
        %v2185 = vpop.f32.mrb[0].mxu0
        %2186 = vdwg.mxu0
        %2187 = vmatprep.subr.bf16.mxu0 %v1325
        %2188 = vmatpush1.bf16.msra.mxu0 %v1324
        %2189 = vmatprep.subr.bf16.mxu0 %v1357
        %2190 = vmatpush1.bf16.msra.mxu0 %v1356
        %2191 = vmatprep.subr.bf16.mxu0 %v1389
        %2192 = vmatpush1.bf16.msra.mxu0 %v1388
        %2193 = vmatprep.subr.bf16.mxu0 %v1421
        %2194 = vmatpush1.bf16.msra.mxu0 %v1420
        %2195 = vmatprep.subr.bf16.mxu0 %v1453
        %2196 = vmatpush1.bf16.msra.mxu0 %v1452
        %2197 = vmatprep.subr.bf16.mxu0 %v1485
        %2198 = vmatpush1.bf16.msra.mxu0 %v1484
        %2199 = vmatprep.subr.bf16.mxu0 %v1517
        %2200 = vmatpush1.bf16.msra.mxu0 %v1516
        %2201 = vmatprep.subr.bf16.mxu0 %v1549
        %2202 = vmatpush1.bf16.msra.mxu0 %v1548
        %2203 = vmatprep.subr.bf16.mxu0 0
        %2204 = vmatpush1.bf16.msra.mxu0 0
        %2205 = vmatprep.subr.bf16.mxu0 0
        %2206 = vmatpush1.bf16.msra.mxu0 0
        %2207 = vmatprep.subr.bf16.mxu0 0
        %2208 = vmatpush1.bf16.msra.mxu0 0
        %2209 = vmatprep.subr.bf16.mxu0 0
        %2210 = vmatpush1.bf16.msra.mxu0 0
        %2211 = vmatprep.subr.bf16.mxu0 0
        %2212 = vmatpush1.bf16.msra.mxu0 0
        %2213 = vmatprep.subr.bf16.mxu0 0
        %2214 = vmatpush1.bf16.msra.mxu0 0
        %2215 = vmatprep.subr.bf16.mxu0 0
        %2216 = vmatpush1.bf16.msra.mxu0 0
        %2217 = vmatprep.subr.bf16.mxu0 0
        %2218 = vmatpush1.bf16.msra.mxu0 0
        %2219 = vmatprep.mubr.bf16.mxu0 0
        %2220 = vmatmul.mubr.bf16.gmra.mrb[0].mxu0 %v281
        %v2221 = vpop.f32.mrb[0].mxu0
        %v2222 = vadd.f32 0.0, %v2221
        %v2223 = vpop.f32.mrb[0].mxu0
        %v2224 = vadd.f32 0.0, %v2223
        %v2225 = vpop.f32.mrb[0].mxu0
        %v2226 = vpop.f32.mrb[0].mxu0
        %2227 = vdwg.mxu0
        %2228 = vmatprep.subr.bf16.mxu0 %v1327
        %2229 = vmatpush1.bf16.msra.mxu0 %v1326
        %2230 = vmatprep.subr.bf16.mxu0 %v1359
        %2231 = vmatpush1.bf16.msra.mxu0 %v1358
        %2232 = vmatprep.subr.bf16.mxu0 %v1391
        %2233 = vmatpush1.bf16.msra.mxu0 %v1390
        %2234 = vmatprep.subr.bf16.mxu0 %v1423
        %2235 = vmatpush1.bf16.msra.mxu0 %v1422
        %2236 = vmatprep.subr.bf16.mxu0 %v1455
        %2237 = vmatpush1.bf16.msra.mxu0 %v1454
        %2238 = vmatprep.subr.bf16.mxu0 %v1487
        %2239 = vmatpush1.bf16.msra.mxu0 %v1486
        %2240 = vmatprep.subr.bf16.mxu0 %v1519
        %2241 = vmatpush1.bf16.msra.mxu0 %v1518
        %2242 = vmatprep.subr.bf16.mxu0 %v1551
        %2243 = vmatpush1.bf16.msra.mxu0 %v1550
        %2244 = vmatprep.subr.bf16.mxu0 0
        %2245 = vmatpush1.bf16.msra.mxu0 0
        %2246 = vmatprep.subr.bf16.mxu0 0
        %2247 = vmatpush1.bf16.msra.mxu0 0
        %2248 = vmatprep.subr.bf16.mxu0 0
        %2249 = vmatpush1.bf16.msra.mxu0 0
        %2250 = vmatprep.subr.bf16.mxu0 0
        %2251 = vmatpush1.bf16.msra.mxu0 0
        %2252 = vmatprep.subr.bf16.mxu0 0
        %2253 = vmatpush1.bf16.msra.mxu0 0
        %2254 = vmatprep.subr.bf16.mxu0 0
        %2255 = vmatpush1.bf16.msra.mxu0 0
        %2256 = vmatprep.subr.bf16.mxu0 0
        %2257 = vmatpush1.bf16.msra.mxu0 0
        %2258 = vmatprep.subr.bf16.mxu0 0
        %2259 = vmatpush1.bf16.msra.mxu0 0
        %2260 = vmatprep.mubr.bf16.mxu0 0
        %2261 = vmatmul.mubr.bf16.gmra.mrb[0].mxu0 %v281
        %v2262 = vpop.f32.mrb[0].mxu0
        %v2263 = vadd.f32 0.0, %v2262
        %v2264 = vpop.f32.mrb[0].mxu0
        %v2265 = vadd.f32 0.0, %v2264
        %v2266 = vpop.f32.mrb[0].mxu0
        %v2267 = vpop.f32.mrb[0].mxu0
        %2268 = vdwg.mxu0
        %2269 = vmatprep.subr.bf16.mxu0 %v1329
        %2270 = vmatpush1.bf16.msra.mxu0 %v1328
        %2271 = vmatprep.subr.bf16.mxu0 %v1361
        %2272 = vmatpush1.bf16.msra.mxu0 %v1360
        %2273 = vmatprep.subr.bf16.mxu0 %v1393
        %2274 = vmatpush1.bf16.msra.mxu0 %v1392
        %2275 = vmatprep.subr.bf16.mxu0 %v1425
        %2276 = vmatpush1.bf16.msra.mxu0 %v1424
        %2277 = vmatprep.subr.bf16.mxu0 %v1457
        %2278 = vmatpush1.bf16.msra.mxu0 %v1456
        %2279 = vmatprep.subr.bf16.mxu0 %v1489
        %2280 = vmatpush1.bf16.msra.mxu0 %v1488
        %2281 = vmatprep.subr.bf16.mxu0 %v1521
        %2282 = vmatpush1.bf16.msra.mxu0 %v1520
        %2283 = vmatprep.subr.bf16.mxu0 %v1553
        %2284 = vmatpush1.bf16.msra.mxu0 %v1552
        %2285 = vmatprep.subr.bf16.mxu0 0
        %2286 = vmatpush1.bf16.msra.mxu0 0
        %2287 = vmatprep.subr.bf16.mxu0 0
        %2288 = vmatpush1.bf16.msra.mxu0 0
        %2289 = vmatprep.subr.bf16.mxu0 0
        %2290 = vmatpush1.bf16.msra.mxu0 0
        %2291 = vmatprep.subr.bf16.mxu0 0
        %2292 = vmatpush1.bf16.msra.mxu0 0
        %2293 = vmatprep.subr.bf16.mxu0 0
        %2294 = vmatpush1.bf16.msra.mxu0 0
        %2295 = vmatprep.subr.bf16.mxu0 0
        %2296 = vmatpush1.bf16.msra.mxu0 0
        %2297 = vmatprep.subr.bf16.mxu0 0
        %2298 = vmatpush1.bf16.msra.mxu0 0
        %2299 = vmatprep.subr.bf16.mxu0 0
        %2300 = vmatpush1.bf16.msra.mxu0 0
        %2301 = vmatprep.mubr.bf16.mxu0 0
        %2302 = vmatmul.mubr.bf16.gmra.mrb[0].mxu0 %v281
        %v2303 = vpop.f32.mrb[0].mxu0
        %v2304 = vadd.f32 0.0, %v2303
        %v2305 = vpop.f32.mrb[0].mxu0
        %v2306 = vadd.f32 0.0, %v2305
        %v2307 = vpop.f32.mrb[0].mxu0
        %v2308 = vpop.f32.mrb[0].mxu0
        %2309 = vdwg.mxu0
        %2310 = vmatprep.subr.bf16.mxu0 %v1331
        %2311 = vmatpush1.bf16.msra.mxu0 %v1330
        %2312 = vmatprep.subr.bf16.mxu0 %v1363
        %2313 = vmatpush1.bf16.msra.mxu0 %v1362
        %2314 = vmatprep.subr.bf16.mxu0 %v1395
        %2315 = vmatpush1.bf16.msra.mxu0 %v1394
        %2316 = vmatprep.subr.bf16.mxu0 %v1427
        %2317 = vmatpush1.bf16.msra.mxu0 %v1426
        %2318 = vmatprep.subr.bf16.mxu0 %v1459
        %2319 = vmatpush1.bf16.msra.mxu0 %v1458
        %2320 = vmatprep.subr.bf16.mxu0 %v1491
        %2321 = vmatpush1.bf16.msra.mxu0 %v1490
        %2322 = vmatprep.subr.bf16.mxu0 %v1523
        %2323 = vmatpush1.bf16.msra.mxu0 %v1522
        %2324 = vmatprep.subr.bf16.mxu0 %v1555
        %2325 = vmatpush1.bf16.msra.mxu0 %v1554
        %2326 = vmatprep.subr.bf16.mxu0 0
        %2327 = vmatpush1.bf16.msra.mxu0 0
        %2328 = vmatprep.subr.bf16.mxu0 0
        %2329 = vmatpush1.bf16.msra.mxu0 0
        %2330 = vmatprep.subr.bf16.mxu0 0
        %2331 = vmatpush1.bf16.msra.mxu0 0
        %2332 = vmatprep.subr.bf16.mxu0 0
        %2333 = vmatpush1.bf16.msra.mxu0 0
        %2334 = vmatprep.subr.bf16.mxu0 0
        %2335 = vmatpush1.bf16.msra.mxu0 0
        %2336 = vmatprep.subr.bf16.mxu0 0
        %2337 = vmatpush1.bf16.msra.mxu0 0
        %2338 = vmatprep.subr.bf16.mxu0 0
        %2339 = vmatpush1.bf16.msra.mxu0 0
        %2340 = vmatprep.subr.bf16.mxu0 0
        %2341 = vmatpush1.bf16.msra.mxu0 0
        %2342 = vmatprep.mubr.bf16.mxu0 0
        %2343 = vmatmul.mubr.bf16.gmra.mrb[0].mxu0 %v281
        %v2344 = vpop.f32.mrb[0].mxu0
        %v2345 = vadd.f32 0.0, %v2344
        %v2346 = vpop.f32.mrb[0].mxu0
        %v2347 = vadd.f32 0.0, %v2346
        %v2348 = vpop.f32.mrb[0].mxu0
        %v2349 = vpop.f32.mrb[0].mxu0
        %2350 = vdwg.mxu0
        %2351 = vmatprep.subr.bf16.mxu0 %v1333
        %2352 = vmatpush1.bf16.msra.mxu0 %v1332
        %2353 = vmatprep.subr.bf16.mxu0 %v1365
        %2354 = vmatpush1.bf16.msra.mxu0 %v1364
        %2355 = vmatprep.subr.bf16.mxu0 %v1397
        %2356 = vmatpush1.bf16.msra.mxu0 %v1396
        %2357 = vmatprep.subr.bf16.mxu0 %v1429
        %2358 = vmatpush1.bf16.msra.mxu0 %v1428
        %2359 = vmatprep.subr.bf16.mxu0 %v1461
        %2360 = vmatpush1.bf16.msra.mxu0 %v1460
        %2361 = vmatprep.subr.bf16.mxu0 %v1493
        %2362 = vmatpush1.bf16.msra.mxu0 %v1492
        %2363 = vmatprep.subr.bf16.mxu0 %v1525
        %2364 = vmatpush1.bf16.msra.mxu0 %v1524
        %2365 = vmatprep.subr.bf16.mxu0 %v1557
        %2366 = vmatpush1.bf16.msra.mxu0 %v1556
        %2367 = vmatprep.subr.bf16.mxu0 0
        %2368 = vmatpush1.bf16.msra.mxu0 0
        %2369 = vmatprep.subr.bf16.mxu0 0
        %2370 = vmatpush1.bf16.msra.mxu0 0
        %2371 = vmatprep.subr.bf16.mxu0 0
        %2372 = vmatpush1.bf16.msra.mxu0 0
        %2373 = vmatprep.subr.bf16.mxu0 0
        %2374 = vmatpush1.bf16.msra.mxu0 0
        %2375 = vmatprep.subr.bf16.mxu0 0
        %2376 = vmatpush1.bf16.msra.mxu0 0
        %2377 = vmatprep.subr.bf16.mxu0 0
        %2378 = vmatpush1.bf16.msra.mxu0 0
        %2379 = vmatprep.subr.bf16.mxu0 0
        %2380 = vmatpush1.bf16.msra.mxu0 0
        %2381 = vmatprep.subr.bf16.mxu0 0
        %2382 = vmatpush1.bf16.msra.mxu0 0
        %2383 = vmatprep.mubr.bf16.mxu0 0
        %2384 = vmatmul.mubr.bf16.gmra.mrb[0].mxu0 %v281
        %v2385 = vpop.f32.mrb[0].mxu0
        %v2386 = vadd.f32 0.0, %v2385
        %v2387 = vpop.f32.mrb[0].mxu0
        %v2388 = vadd.f32 0.0, %v2387
        %v2389 = vpop.f32.mrb[0].mxu0
        %v2390 = vpop.f32.mrb[0].mxu0
        %2391 = vdwg.mxu0
        %2392 = vmatprep.subr.bf16.mxu0 %v1335
        %2393 = vmatpush1.bf16.msra.mxu0 %v1334
        %2394 = vmatprep.subr.bf16.mxu0 %v1367
        %2395 = vmatpush1.bf16.msra.mxu0 %v1366
        %2396 = vmatprep.subr.bf16.mxu0 %v1399
        %2397 = vmatpush1.bf16.msra.mxu0 %v1398
        %2398 = vmatprep.subr.bf16.mxu0 %v1431
        %2399 = vmatpush1.bf16.msra.mxu0 %v1430
        %2400 = vmatprep.subr.bf16.mxu0 %v1463
        %2401 = vmatpush1.bf16.msra.mxu0 %v1462
        %2402 = vmatprep.subr.bf16.mxu0 %v1495
        %2403 = vmatpush1.bf16.msra.mxu0 %v1494
        %2404 = vmatprep.subr.bf16.mxu0 %v1527
        %2405 = vmatpush1.bf16.msra.mxu0 %v1526
        %2406 = vmatprep.subr.bf16.mxu0 %v1559
        %2407 = vmatpush1.bf16.msra.mxu0 %v1558
        %2408 = vmatprep.subr.bf16.mxu0 0
        %2409 = vmatpush1.bf16.msra.mxu0 0
        %2410 = vmatprep.subr.bf16.mxu0 0
        %2411 = vmatpush1.bf16.msra.mxu0 0
        %2412 = vmatprep.subr.bf16.mxu0 0
        %2413 = vmatpush1.bf16.msra.mxu0 0
        %2414 = vmatprep.subr.bf16.mxu0 0
        %2415 = vmatpush1.bf16.msra.mxu0 0
        %2416 = vmatprep.subr.bf16.mxu0 0
        %2417 = vmatpush1.bf16.msra.mxu0 0
        %2418 = vmatprep.subr.bf16.mxu0 0
        %2419 = vmatpush1.bf16.msra.mxu0 0
        %2420 = vmatprep.subr.bf16.mxu0 0
        %2421 = vmatpush1.bf16.msra.mxu0 0
        %2422 = vmatprep.subr.bf16.mxu0 0
        %2423 = vmatpush1.bf16.msra.mxu0 0
        %2424 = vmatprep.mubr.bf16.mxu0 0
        %2425 = vmatmul.mubr.bf16.gmra.mrb[0].mxu0 %v281
        %v2426 = vpop.f32.mrb[0].mxu0
        %v2427 = vadd.f32 0.0, %v2426
        %v2428 = vpop.f32.mrb[0].mxu0
        %v2429 = vadd.f32 0.0, %v2428
        %v2430 = vpop.f32.mrb[0].mxu0
        %v2431 = vpop.f32.mrb[0].mxu0
        %2432 = vdwg.mxu0
        %2433 = vmatprep.subr.bf16.mxu0 %v1337
        %2434 = vmatpush1.bf16.msra.mxu0 %v1336
        %2435 = vmatprep.subr.bf16.mxu0 %v1369
        %2436 = vmatpush1.bf16.msra.mxu0 %v1368
        %2437 = vmatprep.subr.bf16.mxu0 %v1401
        %2438 = vmatpush1.bf16.msra.mxu0 %v1400
        %2439 = vmatprep.subr.bf16.mxu0 %v1433
        %2440 = vmatpush1.bf16.msra.mxu0 %v1432
        %2441 = vmatprep.subr.bf16.mxu0 %v1465
        %2442 = vmatpush1.bf16.msra.mxu0 %v1464
        %2443 = vmatprep.subr.bf16.mxu0 %v1497
        %2444 = vmatpush1.bf16.msra.mxu0 %v1496
        %2445 = vmatprep.subr.bf16.mxu0 %v1529
        %2446 = vmatpush1.bf16.msra.mxu0 %v1528
        %2447 = vmatprep.subr.bf16.mxu0 %v1561
        %2448 = vmatpush1.bf16.msra.mxu0 %v1560
        %2449 = vmatprep.subr.bf16.mxu0 0
        %2450 = vmatpush1.bf16.msra.mxu0 0
        %2451 = vmatprep.subr.bf16.mxu0 0
        %2452 = vmatpush1.bf16.msra.mxu0 0
        %2453 = vmatprep.subr.bf16.mxu0 0
        %2454 = vmatpush1.bf16.msra.mxu0 0
        %2455 = vmatprep.subr.bf16.mxu0 0
        %2456 = vmatpush1.bf16.msra.mxu0 0
        %2457 = vmatprep.subr.bf16.mxu0 0
        %2458 = vmatpush1.bf16.msra.mxu0 0
        %2459 = vmatprep.subr.bf16.mxu0 0
        %2460 = vmatpush1.bf16.msra.mxu0 0
        %2461 = vmatprep.subr.bf16.mxu0 0
        %2462 = vmatpush1.bf16.msra.mxu0 0
        %2463 = vmatprep.subr.bf16.mxu0 0
        %2464 = vmatpush1.bf16.msra.mxu0 0
        %2465 = vmatprep.mubr.bf16.mxu0 0
        %2466 = vmatmul.mubr.bf16.gmra.mrb[0].mxu0 %v281
        %v2467 = vpop.f32.mrb[0].mxu0
        %v2468 = vadd.f32 0.0, %v2467
        %v2469 = vpop.f32.mrb[0].mxu0
        %v2470 = vadd.f32 0.0, %v2469
        %v2471 = vpop.f32.mrb[0].mxu0
        %v2472 = vpop.f32.mrb[0].mxu0
        %2473 = vdwg.mxu0
        %v2474 = vld [vmem:[#allocation8] sm:$0xff]
        %v2475 = vld [vmem:[#allocation8 + $0x8] sm:$0xff]
        %v2476 = vld [vmem:[#allocation8 + $0x10] sm:$0xff]
        %v2477 = vld [vmem:[#allocation8 + $0x18] sm:$0xff]
        %v2482 = vlaneseq
        %v2483 = vshrl.u32 %v2482, 7
        %v2484 = vsub.s32 0, %v2483
        %v2485 = vrot.slane %v2474, %v2484
        %v2486 = vlaneseq
        %v2487 = vshrl.u32 %v2486, 7
        %v2488 = vsub.s32 1, %v2487
        %v2489 = vrot.slane %v2474, %v2488
        %v2490 = vlaneseq
        %v2491 = vshrl.u32 %v2490, 7
        %v2492 = vsub.s32 2, %v2491
        %v2493 = vrot.slane %v2474, %v2492
        %v2494 = vlaneseq
        %v2495 = vshrl.u32 %v2494, 7
        %v2496 = vsub.s32 3, %v2495
        %v2497 = vrot.slane %v2474, %v2496
        %v2498 = vlaneseq
        %v2499 = vshrl.u32 %v2498, 7
        %v2500 = vsub.s32 4, %v2499
        %v2501 = vrot.slane %v2474, %v2500
        %v2502 = vlaneseq
        %v2503 = vshrl.u32 %v2502, 7
        %v2504 = vsub.s32 5, %v2503
        %v2505 = vrot.slane %v2474, %v2504
        %v2506 = vlaneseq
        %v2507 = vshrl.u32 %v2506, 7
        %v2508 = vsub.s32 6, %v2507
        %v2509 = vrot.slane %v2474, %v2508
        %v2510 = vlaneseq
        %v2511 = vshrl.u32 %v2510, 7
        %v2512 = vsub.s32 7, %v2511
        %v2513 = vrot.slane %v2474, %v2512
        %v2514 = vlaneseq
        %v2515 = vshrl.u32 %v2514, 7
        %v2516 = vsub.s32 0, %v2515
        %v2517 = vrot.slane %v2475, %v2516
        %v2518 = vlaneseq
        %v2519 = vshrl.u32 %v2518, 7
        %v2520 = vsub.s32 1, %v2519
        %v2521 = vrot.slane %v2475, %v2520
        %v2522 = vlaneseq
        %v2523 = vshrl.u32 %v2522, 7
        %v2524 = vsub.s32 2, %v2523
        %v2525 = vrot.slane %v2475, %v2524
        %v2526 = vlaneseq
        %v2527 = vshrl.u32 %v2526, 7
        %v2528 = vsub.s32 3, %v2527
        %v2529 = vrot.slane %v2475, %v2528
        %v2530 = vlaneseq
        %v2531 = vshrl.u32 %v2530, 7
        %v2532 = vsub.s32 4, %v2531
        %v2533 = vrot.slane %v2475, %v2532
        %v2534 = vlaneseq
        %v2535 = vshrl.u32 %v2534, 7
        %v2536 = vsub.s32 5, %v2535
        %v2537 = vrot.slane %v2475, %v2536
        %v2538 = vlaneseq
        %v2539 = vshrl.u32 %v2538, 7
        %v2540 = vsub.s32 6, %v2539
        %v2541 = vrot.slane %v2475, %v2540
        %v2542 = vlaneseq
        %v2543 = vshrl.u32 %v2542, 7
        %v2544 = vsub.s32 7, %v2543
        %v2545 = vrot.slane %v2475, %v2544
        %v2546 = vlaneseq
        %v2547 = vshrl.u32 %v2546, 7
        %v2548 = vsub.s32 0, %v2547
        %v2549 = vrot.slane %v2476, %v2548
        %v2550 = vlaneseq
        %v2551 = vshrl.u32 %v2550, 7
        %v2552 = vsub.s32 1, %v2551
        %v2553 = vrot.slane %v2476, %v2552
        %v2554 = vlaneseq
        %v2555 = vshrl.u32 %v2554, 7
        %v2556 = vsub.s32 2, %v2555
        %v2557 = vrot.slane %v2476, %v2556
        %v2558 = vlaneseq
        %v2559 = vshrl.u32 %v2558, 7
        %v2560 = vsub.s32 3, %v2559
        %v2561 = vrot.slane %v2476, %v2560
        %v2562 = vlaneseq
        %v2563 = vshrl.u32 %v2562, 7
        %v2564 = vsub.s32 4, %v2563
        %v2565 = vrot.slane %v2476, %v2564
        %v2566 = vlaneseq
        %v2567 = vshrl.u32 %v2566, 7
        %v2568 = vsub.s32 5, %v2567
        %v2569 = vrot.slane %v2476, %v2568
        %v2570 = vlaneseq
        %v2571 = vshrl.u32 %v2570, 7
        %v2572 = vsub.s32 6, %v2571
        %v2573 = vrot.slane %v2476, %v2572
        %v2574 = vlaneseq
        %v2575 = vshrl.u32 %v2574, 7
        %v2576 = vsub.s32 7, %v2575
        %v2577 = vrot.slane %v2476, %v2576
        %v2578 = vlaneseq
        %v2579 = vshrl.u32 %v2578, 7
        %v2580 = vsub.s32 0, %v2579
        %v2581 = vrot.slane %v2477, %v2580
        %v2582 = vlaneseq
        %v2583 = vshrl.u32 %v2582, 7
        %v2584 = vsub.s32 1, %v2583
        %v2585 = vrot.slane %v2477, %v2584
        %v2586 = vlaneseq
        %v2587 = vshrl.u32 %v2586, 7
        %v2588 = vsub.s32 2, %v2587
        %v2589 = vrot.slane %v2477, %v2588
        %v2590 = vlaneseq
        %v2591 = vshrl.u32 %v2590, 7
        %v2592 = vsub.s32 3, %v2591
        %v2593 = vrot.slane %v2477, %v2592
        %v2594 = vlaneseq
        %v2595 = vshrl.u32 %v2594, 7
        %v2596 = vsub.s32 4, %v2595
        %v2597 = vrot.slane %v2477, %v2596
        %v2598 = vlaneseq
        %v2599 = vshrl.u32 %v2598, 7
        %v2600 = vsub.s32 5, %v2599
        %v2601 = vrot.slane %v2477, %v2600
        %v2602 = vlaneseq
        %v2603 = vshrl.u32 %v2602, 7
        %v2604 = vsub.s32 6, %v2603
        %v2605 = vrot.slane %v2477, %v2604
        %v2606 = vlaneseq
        %v2607 = vshrl.u32 %v2606, 7
        %v2608 = vsub.s32 7, %v2607
        %v2609 = vrot.slane %v2477, %v2608
        %v2642 = vmul.f32 %v1853, %v2485
        %v2643 = vmul.f32 %v1855, %v2489
        %v2644 = vmul.f32 %v1894, %v2493
        %v2645 = vmul.f32 %v1896, %v2497
        %v2646 = vmul.f32 %v1935, %v2501
        %v2647 = vmul.f32 %v1937, %v2505
        %v2648 = vmul.f32 %v1976, %v2509
        %v2649 = vmul.f32 %v1978, %v2513
        %v2650 = vmul.f32 %v2017, %v2517
        %v2651 = vmul.f32 %v2019, %v2521
        %v2652 = vmul.f32 %v2058, %v2525
        %v2653 = vmul.f32 %v2060, %v2529
        %v2654 = vmul.f32 %v2099, %v2533
        %v2655 = vmul.f32 %v2101, %v2537
        %v2656 = vmul.f32 %v2140, %v2541
        %v2657 = vmul.f32 %v2142, %v2545
        %v2658 = vmul.f32 %v2181, %v2549
        %v2659 = vmul.f32 %v2183, %v2553
        %v2660 = vmul.f32 %v2222, %v2557
        %v2661 = vmul.f32 %v2224, %v2561
        %v2662 = vmul.f32 %v2263, %v2565
        %v2663 = vmul.f32 %v2265, %v2569
        %v2664 = vmul.f32 %v2304, %v2573
        %v2665 = vmul.f32 %v2306, %v2577
        %v2666 = vmul.f32 %v2345, %v2581
        %v2667 = vmul.f32 %v2347, %v2585
        %v2668 = vmul.f32 %v2386, %v2589
        %v2669 = vmul.f32 %v2388, %v2593
        %v2670 = vmul.f32 %v2427, %v2597
        %v2671 = vmul.f32 %v2429, %v2601
        %v2672 = vmul.f32 %v2468, %v2605
        %v2673 = vmul.f32 %v2470, %v2609
        %v2674 = vld [vmem:[#allocation7] sm:$0xff]
        %v2675 = vld [vmem:[#allocation7 + $0x8] sm:$0xff]
        %v2676 = vld [vmem:[#allocation7 + $0x10] sm:$0xff]
        %v2677 = vld [vmem:[#allocation7 + $0x18] sm:$0xff]
        %v2678 = vld [vmem:[#allocation7 + $0x20] sm:$0xff]
        %v2679 = vld [vmem:[#allocation7 + $0x28] sm:$0xff]
        %v2680 = vld [vmem:[#allocation7 + $0x30] sm:$0xff]
        %v2681 = vld [vmem:[#allocation7 + $0x38] sm:$0xff]
        %v2690 = vcombine.high %v2674, %v2674
        %v2692 = vunpack.c.l.s4 1983009808
        %v2693 = vunpack.c.0.s8 %v2692
        %v2694 = vlaneseq
        %v2695 = vshrl.u32 %v2694, 7
        %v2696 = vsub.s32 %v2693, %v2695
        %v2697 = vrot.slane %v2674, %v2696
        %v2699 = vunpack.c.l.s4 1983009808
        %v2700 = vunpack.c.0.s8 %v2699
        %v2701 = vlaneseq
        %v2702 = vshrl.u32 %v2701, 7
        %v2703 = vsub.s32 %v2700, %v2702
        %v2704 = vrot.slane %v2690, %v2703
        %v2705 = vcombine.high %v2697, %v2697
        %v2706 = vcombine.high %v2704, %v2704
        %v2707 = vcombine.high %v2675, %v2675
        %v2709 = vunpack.c.l.s4 1983009808
        %v2710 = vunpack.c.0.s8 %v2709
        %v2711 = vlaneseq
        %v2712 = vshrl.u32 %v2711, 7
        %v2713 = vsub.s32 %v2710, %v2712
        %v2714 = vrot.slane %v2675, %v2713
        %v2716 = vunpack.c.l.s4 1983009808
        %v2717 = vunpack.c.0.s8 %v2716
        %v2718 = vlaneseq
        %v2719 = vshrl.u32 %v2718, 7
        %v2720 = vsub.s32 %v2717, %v2719
        %v2721 = vrot.slane %v2707, %v2720
        %v2722 = vcombine.high %v2714, %v2714
        %v2723 = vcombine.high %v2721, %v2721
        %v2724 = vcombine.high %v2676, %v2676
        %v2726 = vunpack.c.l.s4 1983009808
        %v2727 = vunpack.c.0.s8 %v2726
        %v2728 = vlaneseq
        %v2729 = vshrl.u32 %v2728, 7
        %v2730 = vsub.s32 %v2727, %v2729
        %v2731 = vrot.slane %v2676, %v2730
        %v2733 = vunpack.c.l.s4 1983009808
        %v2734 = vunpack.c.0.s8 %v2733
        %v2735 = vlaneseq
        %v2736 = vshrl.u32 %v2735, 7
        %v2737 = vsub.s32 %v2734, %v2736
        %v2738 = vrot.slane %v2724, %v2737
        %v2739 = vcombine.high %v2731, %v2731
        %v2740 = vcombine.high %v2738, %v2738
        %v2741 = vcombine.high %v2677, %v2677
        %v2743 = vunpack.c.l.s4 1983009808
        %v2744 = vunpack.c.0.s8 %v2743
        %v2745 = vlaneseq
        %v2746 = vshrl.u32 %v2745, 7
        %v2747 = vsub.s32 %v2744, %v2746
        %v2748 = vrot.slane %v2677, %v2747
        %v2750 = vunpack.c.l.s4 1983009808
        %v2751 = vunpack.c.0.s8 %v2750
        %v2752 = vlaneseq
        %v2753 = vshrl.u32 %v2752, 7
        %v2754 = vsub.s32 %v2751, %v2753
        %v2755 = vrot.slane %v2741, %v2754
        %v2756 = vcombine.high %v2748, %v2748
        %v2757 = vcombine.high %v2755, %v2755
        %v2758 = vcombine.high %v2678, %v2678
        %v2760 = vunpack.c.l.s4 1983009808
        %v2761 = vunpack.c.0.s8 %v2760
        %v2762 = vlaneseq
        %v2763 = vshrl.u32 %v2762, 7
        %v2764 = vsub.s32 %v2761, %v2763
        %v2765 = vrot.slane %v2678, %v2764
        %v2767 = vunpack.c.l.s4 1983009808
        %v2768 = vunpack.c.0.s8 %v2767
        %v2769 = vlaneseq
        %v2770 = vshrl.u32 %v2769, 7
        %v2771 = vsub.s32 %v2768, %v2770
        %v2772 = vrot.slane %v2758, %v2771
        %v2773 = vcombine.high %v2765, %v2765
        %v2774 = vcombine.high %v2772, %v2772
        %v2775 = vcombine.high %v2679, %v2679
        %v2777 = vunpack.c.l.s4 1983009808
        %v2778 = vunpack.c.0.s8 %v2777
        %v2779 = vlaneseq
        %v2780 = vshrl.u32 %v2779, 7
        %v2781 = vsub.s32 %v2778, %v2780
        %v2782 = vrot.slane %v2679, %v2781
        %v2784 = vunpack.c.l.s4 1983009808
        %v2785 = vunpack.c.0.s8 %v2784
        %v2786 = vlaneseq
        %v2787 = vshrl.u32 %v2786, 7
        %v2788 = vsub.s32 %v2785, %v2787
        %v2789 = vrot.slane %v2775, %v2788
        %v2790 = vcombine.high %v2782, %v2782
        %v2791 = vcombine.high %v2789, %v2789
        %v2792 = vcombine.high %v2680, %v2680
        %v2794 = vunpack.c.l.s4 1983009808
        %v2795 = vunpack.c.0.s8 %v2794
        %v2796 = vlaneseq
        %v2797 = vshrl.u32 %v2796, 7
        %v2798 = vsub.s32 %v2795, %v2797
        %v2799 = vrot.slane %v2680, %v2798
        %v2801 = vunpack.c.l.s4 1983009808
        %v2802 = vunpack.c.0.s8 %v2801
        %v2803 = vlaneseq
        %v2804 = vshrl.u32 %v2803, 7
        %v2805 = vsub.s32 %v2802, %v2804
        %v2806 = vrot.slane %v2792, %v2805
        %v2807 = vcombine.high %v2799, %v2799
        %v2808 = vcombine.high %v2806, %v2806
        %v2809 = vcombine.high %v2681, %v2681
        %v2811 = vunpack.c.l.s4 1983009808
        %v2812 = vunpack.c.0.s8 %v2811
        %v2813 = vlaneseq
        %v2814 = vshrl.u32 %v2813, 7
        %v2815 = vsub.s32 %v2812, %v2814
        %v2816 = vrot.slane %v2681, %v2815
        %v2818 = vunpack.c.l.s4 1983009808
        %v2819 = vunpack.c.0.s8 %v2818
        %v2820 = vlaneseq
        %v2821 = vshrl.u32 %v2820, 7
        %v2822 = vsub.s32 %v2819, %v2821
        %v2823 = vrot.slane %v2809, %v2822
        %v2824 = vcombine.high %v2816, %v2816
        %v2825 = vcombine.high %v2823, %v2823
        %v2858 = vadd.f32 %v2642, %v2697
        %v2859 = vadd.f32 %v2643, %v2705
        %v2860 = vadd.f32 %v2644, %v2704
        %v2861 = vadd.f32 %v2645, %v2706
        %v2862 = vadd.f32 %v2646, %v2714
        %v2863 = vadd.f32 %v2647, %v2722
        %v2864 = vadd.f32 %v2648, %v2721
        %v2865 = vadd.f32 %v2649, %v2723
        %v2866 = vadd.f32 %v2650, %v2731
        %v2867 = vadd.f32 %v2651, %v2739
        %v2868 = vadd.f32 %v2652, %v2738
        %v2869 = vadd.f32 %v2653, %v2740
        %v2870 = vadd.f32 %v2654, %v2748
        %v2871 = vadd.f32 %v2655, %v2756
        %v2872 = vadd.f32 %v2656, %v2755
        %v2873 = vadd.f32 %v2657, %v2757
        %v2874 = vadd.f32 %v2658, %v2765
        %v2875 = vadd.f32 %v2659, %v2773
        %v2876 = vadd.f32 %v2660, %v2772
        %v2877 = vadd.f32 %v2661, %v2774
        %v2878 = vadd.f32 %v2662, %v2782
        %v2879 = vadd.f32 %v2663, %v2790
        %v2880 = vadd.f32 %v2664, %v2789
        %v2881 = vadd.f32 %v2665, %v2791
        %v2882 = vadd.f32 %v2666, %v2799
        %v2883 = vadd.f32 %v2667, %v2807
        %v2884 = vadd.f32 %v2668, %v2806
        %v2885 = vadd.f32 %v2669, %v2808
        %v2886 = vadd.f32 %v2670, %v2816
        %v2887 = vadd.f32 %v2671, %v2824
        %v2888 = vadd.f32 %v2672, %v2823
        %v2889 = vadd.f32 %v2673, %v2825
        %v2922 = vcombine.low %v2858, %v2859
        %v2923 = vcombine.low %v2860, %v2861
        %v2925 = vunpack.c.l.s4 1983009808
        %v2926 = vunpack.c.0.s8 %v2925
        %v2927 = vlaneseq
        %v2928 = vshrl.u32 %v2927, 7
        %v2929 = vsub.s32 %v2926, %v2928
        %v2930 = vrot.slane %v2922, %v2929
        %v2932 = vunpack.c.l.s4 1983009808
        %v2933 = vunpack.c.0.s8 %v2932
        %v2934 = vlaneseq
        %v2935 = vshrl.u32 %v2934, 7
        %v2936 = vsub.s32 %v2933, %v2935
        %v2937 = vrot.slane %v2923, %v2936
        %v2938 = vcombine.low %v2930, %v2937
        %v2939 = vcombine.low %v2862, %v2863
        %v2940 = vcombine.low %v2864, %v2865
        %v2942 = vunpack.c.l.s4 1983009808
        %v2943 = vunpack.c.0.s8 %v2942
        %v2944 = vlaneseq
        %v2945 = vshrl.u32 %v2944, 7
        %v2946 = vsub.s32 %v2943, %v2945
        %v2947 = vrot.slane %v2939, %v2946
        %v2949 = vunpack.c.l.s4 1983009808
        %v2950 = vunpack.c.0.s8 %v2949
        %v2951 = vlaneseq
        %v2952 = vshrl.u32 %v2951, 7
        %v2953 = vsub.s32 %v2950, %v2952
        %v2954 = vrot.slane %v2940, %v2953
        %v2955 = vcombine.low %v2947, %v2954
        %v2956 = vcombine.low %v2866, %v2867
        %v2957 = vcombine.low %v2868, %v2869
        %v2959 = vunpack.c.l.s4 1983009808
        %v2960 = vunpack.c.0.s8 %v2959
        %v2961 = vlaneseq
        %v2962 = vshrl.u32 %v2961, 7
        %v2963 = vsub.s32 %v2960, %v2962
        %v2964 = vrot.slane %v2956, %v2963
        %v2966 = vunpack.c.l.s4 1983009808
        %v2967 = vunpack.c.0.s8 %v2966
        %v2968 = vlaneseq
        %v2969 = vshrl.u32 %v2968, 7
        %v2970 = vsub.s32 %v2967, %v2969
        %v2971 = vrot.slane %v2957, %v2970
        %v2972 = vcombine.low %v2964, %v2971
        %v2973 = vcombine.low %v2870, %v2871
        %v2974 = vcombine.low %v2872, %v2873
        %v2976 = vunpack.c.l.s4 1983009808
        %v2977 = vunpack.c.0.s8 %v2976
        %v2978 = vlaneseq
        %v2979 = vshrl.u32 %v2978, 7
        %v2980 = vsub.s32 %v2977, %v2979
        %v2981 = vrot.slane %v2973, %v2980
        %v2983 = vunpack.c.l.s4 1983009808
        %v2984 = vunpack.c.0.s8 %v2983
        %v2985 = vlaneseq
        %v2986 = vshrl.u32 %v2985, 7
        %v2987 = vsub.s32 %v2984, %v2986
        %v2988 = vrot.slane %v2974, %v2987
        %v2989 = vcombine.low %v2981, %v2988
        %v2990 = vcombine.low %v2874, %v2875
        %v2991 = vcombine.low %v2876, %v2877
        %v2993 = vunpack.c.l.s4 1983009808
        %v2994 = vunpack.c.0.s8 %v2993
        %v2995 = vlaneseq
        %v2996 = vshrl.u32 %v2995, 7
        %v2997 = vsub.s32 %v2994, %v2996
        %v2998 = vrot.slane %v2990, %v2997
        %v3000 = vunpack.c.l.s4 1983009808
        %v3001 = vunpack.c.0.s8 %v3000
        %v3002 = vlaneseq
        %v3003 = vshrl.u32 %v3002, 7
        %v3004 = vsub.s32 %v3001, %v3003
        %v3005 = vrot.slane %v2991, %v3004
        %v3006 = vcombine.low %v2998, %v3005
        %v3007 = vcombine.low %v2878, %v2879
        %v3008 = vcombine.low %v2880, %v2881
        %v3010 = vunpack.c.l.s4 1983009808
        %v3011 = vunpack.c.0.s8 %v3010
        %v3012 = vlaneseq
        %v3013 = vshrl.u32 %v3012, 7
        %v3014 = vsub.s32 %v3011, %v3013
        %v3015 = vrot.slane %v3007, %v3014
        %v3017 = vunpack.c.l.s4 1983009808
        %v3018 = vunpack.c.0.s8 %v3017
        %v3019 = vlaneseq
        %v3020 = vshrl.u32 %v3019, 7
        %v3021 = vsub.s32 %v3018, %v3020
        %v3022 = vrot.slane %v3008, %v3021
        %v3023 = vcombine.low %v3015, %v3022
        %v3024 = vcombine.low %v2882, %v2883
        %v3025 = vcombine.low %v2884, %v2885
        %v3027 = vunpack.c.l.s4 1983009808
        %v3028 = vunpack.c.0.s8 %v3027
        %v3029 = vlaneseq
        %v3030 = vshrl.u32 %v3029, 7
        %v3031 = vsub.s32 %v3028, %v3030
        %v3032 = vrot.slane %v3024, %v3031
        %v3034 = vunpack.c.l.s4 1983009808
        %v3035 = vunpack.c.0.s8 %v3034
        %v3036 = vlaneseq
        %v3037 = vshrl.u32 %v3036, 7
        %v3038 = vsub.s32 %v3035, %v3037
        %v3039 = vrot.slane %v3025, %v3038
        %v3040 = vcombine.low %v3032, %v3039
        %v3041 = vcombine.low %v2886, %v2887
        %v3042 = vcombine.low %v2888, %v2889
        %v3044 = vunpack.c.l.s4 1983009808
        %v3045 = vunpack.c.0.s8 %v3044
        %v3046 = vlaneseq
        %v3047 = vshrl.u32 %v3046, 7
        %v3048 = vsub.s32 %v3045, %v3047
        %v3049 = vrot.slane %v3041, %v3048
        %v3051 = vunpack.c.l.s4 1983009808
        %v3052 = vunpack.c.0.s8 %v3051
        %v3053 = vlaneseq
        %v3054 = vshrl.u32 %v3053, 7
        %v3055 = vsub.s32 %v3052, %v3054
        %v3056 = vrot.slane %v3042, %v3055
        %v3057 = vcombine.low %v3049, %v3056
        %3066 = vst [vmem:[%s277] sm:$0xff] %v2938
        %3067 = vst [vmem:[%s277 + $0x8] sm:$0xff] %v2955
        %3068 = vst [vmem:[%s277 + $0x10] sm:$0xff] %v2972
        %3069 = vst [vmem:[%s277 + $0x18] sm:$0xff] %v2989
        %3070 = vst [vmem:[%s277 + $0x20] sm:$0xff] %v3006
        %3071 = vst [vmem:[%s277 + $0x28] sm:$0xff] %v3023
        %3072 = vst [vmem:[%s277 + $0x30] sm:$0xff] %v3040
        %3073 = vst [vmem:[%s277 + $0x38] sm:$0xff] %v3057
        %s3074 = sand.u32 %s141, 1
        %s3075 = scalar_lea.sflag [#allocation4], %s3074
        %s3076 = sand.u32 %s141, 1
        %s3077 = smul.addr %s3076, 64
        %s3078 = scalar_lea.vmem [#allocation10], %s3077
        // Predicated region
        $region53: #{tpu_custom_call.1} parent=35 // pred_check
          %p3079 = pneg %p151
        $region54: #{tpu_custom_call.1} parent=35 // pred_check_branch
          %3081 = sbr.rel (%p3079) target = $region56
        $region55: #{tpu_custom_call.1} parent=35 // pred_region
          %s3083 = ssub.s32 1024, 1024
          %3084 = vsyncadd %s3075, %s3083
          %s3085 = smul.addr %s27, 32
          %s3086 = smul.addr %s28, 32
          %s3087 = sadd.s32 %s3085, %s3086
          %s3088 = smul.addr %s3087, 32
          %s3089 = scalar_lea.hbm %s4, %s3088
          %s3091 = sshll.u32 %s3078, 4
          %s3092 = int_to_ptr.vmem [resolvable:$true] %s3091
          %3094 = dma.vmem_to_hbm [thread:$0]  %s3092, 1024, %s3089, %s3075
        $region56: #{tpu_custom_call.1} parent=35 // pred_fallthru
          _
      $region36: #{tpu_custom_call.1} parent=5 // pred_fallthru
        _
      %p3095 = scmp.le.s32.totalorder 2, %s18
      // Predicated region
      $region57: #{tpu_custom_call.1} parent=5 // pred_check
        %p3096 = pneg %p3095
      $region58: #{tpu_custom_call.1} parent=5 // pred_check_branch
        %3098 = sbr.rel (%p3096) target = $region60
      $region59: #{tpu_custom_call.1} parent=5 // pred_region
        %s3099 = ssub.s32 %s18, 2
        // Predicated region
        $region61: #{tpu_custom_call.1} parent=59 // pred_check
          %p3100 = pneg %p157
        $region62: #{tpu_custom_call.1} parent=59 // pred_check_branch
          %3102 = sbr.rel (%p3100) target = $region64
        $region63: #{tpu_custom_call.1} parent=59 // pred_region
          %s3103 = sand.u32 %s142, 1
          %s3104 = scalar_lea.sflag [#allocation4], %s3103
          %s3105 = sand.u32 %s142, 1
          %s3106 = smul.addr %s3105, 64
          %s3107 = scalar_lea.vmem [#allocation10], %s3106
          %3108 = dma.done %s3104, 1024
        $region64: #{tpu_custom_call.1} parent=59 // pred_fallthru
          _
      $region60: #{tpu_custom_call.1} parent=5 // pred_fallthru
        _
    $region6: #{tpu_custom_call.1} parent=1 // loop_footer
      %s22 = sadd.s32 1, %s18
    $region7: #{tpu_custom_call.1} parent=1 // loop_footer_branch
      %17 = sbr.rel target = $region3
    $region8: #{tpu_custom_call.1} parent=1 // loop_exit
      _
    %3109 = vsyncpa [#allocation3], 1
    %s3110 = scalar_lea.sflag [#allocation3], 1
    %3111 = vsyncpa %s3110, 1
    %3112 = vsyncpa [#allocation6], 1
    %3113 = vsyncpa [#allocation9], 1
    %3114 = vsyncpa [#allocation4], 1
    %s3115 = scalar_lea.sflag [#allocation4], 1
    %3116 = vsyncpa %s3115, 1

</llo_original>
